<compile_context>
chip_gen: v6e
topology: v6e:2x2x1
jax: 0.10.0
libtpu: 0.0.40
codegen_flags: <defaults>
</compile_context>

<pallas_src>
import functools

import jax
import jax.numpy as jnp
from jax.experimental import pallas as pl
from jax.experimental.pallas import tpu as pltpu


# ---------------------------------------------------------------------------
# Kernels
# ---------------------------------------------------------------------------

def _layer_norm(x, gamma, beta, eps=1e-5):
    mu = jnp.mean(x, axis=-1, keepdims=True)
    xc = x - mu
    var = jnp.mean(xc * xc, axis=-1, keepdims=True)
    inv = jax.lax.rsqrt(var + eps)
    return xc * inv * gamma + beta


def _embed_kernel(x_ref, pos_ref, wpre_ref, wpos_ref, bpos_ref, o_ref):
    # h = x @ W_pre + pos @ W_pos + b_pos
    h = jnp.dot(x_ref[...], wpre_ref[...], preferred_element_type=jnp.float32)
    h = h + jnp.dot(pos_ref[...], wpos_ref[...],
                    preferred_element_type=jnp.float32) + bpos_ref[...]
    o_ref[...] = h.astype(o_ref.dtype)


def _linear_kernel(x_ref, w_ref, b_ref, o_ref):
    o_ref[...] = (jnp.dot(x_ref[...], w_ref[...],
                          preferred_element_type=jnp.float32)
                  + b_ref[...]).astype(o_ref.dtype)


def _transformer_layer_kernel(xq_ref, xkv_ref, bias_ref,
                              wqkv_ref, bqkv_ref, wo_ref, bo_ref,
                              w1_ref, b1_ref, w2_ref, b2_ref,
                              g1_ref, be1_ref, g2_ref, be2_ref,
                              o_ref, *, num_heads, key_dim):
    D = num_heads * key_dim

    xq = xq_ref[...]          # (TN, D)  query / residual row tile
    xkv = xkv_ref[...]        # (N,  D)  full node matrix for keys / values
    bias = bias_ref[...]      # (TN, N)  additive attention mask (+ identity bias)

    wqkv = wqkv_ref[...]      # (D, 3D) packed projections -> lane-dense MXU matmul
    bqkv = bqkv_ref[...]      # (1, 3D)

    # Keys / values for ALL nodes (heads fused along lanes).
    kv = jnp.dot(xkv, wqkv, preferred_element_type=jnp.float32) + bqkv   # (N, 3D)
    k_all = kv[:, D:2 * D]
    v_all = kv[:, 2 * D:3 * D]
    # Queries for this row tile only.
    q_all = (jnp.dot(xq, wqkv[:, :D], preferred_element_type=jnp.float32)
             + bqkv[:, :D])                                              # (TN, D)

    scale = 1.0 / float(key_dim) ** 0.5
    heads = []
    for h in range(num_heads):                       # static unrolled head loop
        lo, hi = h * key_dim, (h + 1) * key_dim
        qh = q_all[:, lo:hi]                         # (TN, dk)
        kh = k_all[:, lo:hi]                         # (N,  dk)
        vh = v_all[:, lo:hi]                         # (N,  dk)
        # scores: contract on dk (MXU), no explicit transpose needed.
        s = jax.lax.dot_general(qh, kh, (((1,), (1,)), ((), ())),
                                preferred_element_type=jnp.float32)      # (TN, N)
        s = s * scale + bias
        m = jnp.max(s, axis=-1, keepdims=True)
        p = jnp.exp(s - m)
        denom = jnp.sum(p, axis=-1, keepdims=True)
        att = p * pl.reciprocal(denom, approx=True)
        heads.append(jnp.dot(att, vh, preferred_element_type=jnp.float32))
    attn = jnp.concatenate(heads, axis=-1)           # (TN, D) lane-dense concat
    attn = (jnp.dot(attn, wo_ref[...], preferred_element_type=jnp.float32)
            + bo_ref[...])

    # Residual + LayerNorm (attention sublayer).
    h1 = _layer_norm(xq + attn, g1_ref[...], be1_ref[...])

    # Feed-forward sublayer.
    ff = jnp.dot(h1, w1_ref[...], preferred_element_type=jnp.float32) + b1_ref[...]
    ff = jnp.maximum(ff, 0.0)
    ff = jnp.dot(ff, w2_ref[...], preferred_element_type=jnp.float32) + b2_ref[...]

    out = _layer_norm(h1 + ff, g2_ref[...], be2_ref[...])
    o_ref[...] = out.astype(o_ref.dtype)


# ---------------------------------------------------------------------------
# pallas_call wrappers
# ---------------------------------------------------------------------------

def _row_grid(N, row_tile):
    TN = N if row_tile is None else min(row_tile, N)
    assert N % TN == 0, (N, TN)
    return TN, (N // TN,)


def embed(x, pos, w_pre, w_pos, b_pos, *, row_tile=None):
    N, Din = x.shape
    _, P = pos.shape
    D = w_pre.shape[1]
    TN, grid = _row_grid(N, row_tile)
    full = lambda i: (0, 0)
    return pl.pallas_call(
        _embed_kernel,
        out_shape=jax.ShapeDtypeStruct((N, D), jnp.float32),
        grid_spec=pltpu.PrefetchScalarGridSpec(
            num_scalar_prefetch=0,
            grid=grid,
            in_specs=[
                pl.BlockSpec((TN, Din), lambda i: (i, 0)),
                pl.BlockSpec((TN, P), lambda i: (i, 0)),
                pl.BlockSpec((Din, D), full),
                pl.BlockSpec((P, D), full),
                pl.BlockSpec((1, D), full),
            ],
            out_specs=pl.BlockSpec((TN, D), lambda i: (i, 0)),
        ),
        compiler_params=pltpu.CompilerParams(dimension_semantics=("parallel",)),
    )(x, pos, w_pre, w_pos, b_pos)


def linear(x, w, b, *, row_tile=None):
    N, Din = x.shape
    Dout = w.shape[1]
    TN, grid = _row_grid(N, row_tile)
    full = lambda i: (0, 0)
    return pl.pallas_call(
        _linear_kernel,
        out_shape=jax.ShapeDtypeStruct((N, Dout), jnp.float32),
        grid_spec=pltpu.PrefetchScalarGridSpec(
            num_scalar_prefetch=0,
            grid=grid,
            in_specs=[
                pl.BlockSpec((TN, Din), lambda i: (i, 0)),
                pl.BlockSpec((Din, Dout), full),
                pl.BlockSpec((1, Dout), full),
            ],
            out_specs=pl.BlockSpec((TN, Dout), lambda i: (i, 0)),
        ),
        compiler_params=pltpu.CompilerParams(dimension_semantics=("parallel",)),
    )(x, w, b)


def transformer_layer(x, attn_bias, p, *, num_heads, key_dim, row_tile=None):
    N, D = x.shape
    F = p["w1"].shape[1]
    TN, grid = _row_grid(N, row_tile)
    full = lambda i: (0, 0)
    return pl.pallas_call(
        functools.partial(_transformer_layer_kernel,
                          num_heads=num_heads, key_dim=key_dim),
        out_shape=jax.ShapeDtypeStruct((N, D), jnp.float32),
        grid_spec=pltpu.PrefetchScalarGridSpec(
            num_scalar_prefetch=0,
            grid=grid,
            in_specs=[
                pl.BlockSpec((TN, D), lambda i: (i, 0)),   # query / residual tile
                pl.BlockSpec((N, D), full),                # full x for K/V
                pl.BlockSpec((TN, N), lambda i: (i, 0)),   # additive mask tile
                pl.BlockSpec((D, 3 * D), full),
                pl.BlockSpec((1, 3 * D), full),
                pl.BlockSpec((D, D), full),
                pl.BlockSpec((1, D), full),
                pl.BlockSpec((D, F), full),
                pl.BlockSpec((1, F), full),
                pl.BlockSpec((F, D), full),
                pl.BlockSpec((1, D), full),
                pl.BlockSpec((1, D), full),
                pl.BlockSpec((1, D), full),
                pl.BlockSpec((1, D), full),
                pl.BlockSpec((1, D), full),
            ],
            out_specs=pl.BlockSpec((TN, D), lambda i: (i, 0)),
        ),
        compiler_params=pltpu.CompilerParams(dimension_semantics=("parallel",)),
    )(x, x, attn_bias,
      p["wqkv"], p["bqkv"], p["wo"], p["bo"],
      p["w1"], p["b1"], p["w2"], p["b2"],
      p["ln1_g"], p["ln1_b"], p["ln2_g"], p["ln2_b"])


# ---------------------------------------------------------------------------
# Parameters & forward (mirrors VanillaTransformer.forward)
# ---------------------------------------------------------------------------

def init_transformer_params(key, input_dim, num_classes, internal_dim, num_layers,
                            num_heads, pos_emb_dim, nonlinear_internal_dim=None):
    assert num_layers >= 1
    key_dim = internal_dim // num_heads
    assert key_dim > 0
    if nonlinear_internal_dim is None:
        nonlinear_internal_dim = 2 * internal_dim
    D, F = internal_dim, nonlinear_internal_dim

    def dense(k, fan_in, shape):
        bound = 1.0 / float(fan_in) ** 0.5
        return jax.random.uniform(k, shape, jnp.float32, -bound, bound)

    keys = jax.random.split(key, 5 + num_layers)
    params = dict(
        pre_w=dense(keys[0], input_dim, (input_dim, D)),
        pos_w=dense(keys[1], pos_emb_dim, (pos_emb_dim, D)),
        pos_b=dense(keys[2], pos_emb_dim, (1, D)),
        post_w=dense(keys[3], D, (D, num_classes)),
        post_b=dense(keys[4], D, (1, num_classes)),
        layers=[],
    )
    for li in range(num_layers):
        ks = jax.random.split(keys[5 + li], 4)
        params["layers"].append(dict(
            wqkv=dense(ks[0], D, (D, 3 * D)),
            bqkv=jnp.zeros((1, 3 * D), jnp.float32),
            wo=dense(ks[1], D, (D, D)),
            bo=jnp.zeros((1, D), jnp.float32),
            w1=dense(ks[2], D, (D, F)),
            b1=jnp.zeros((1, F), jnp.float32),
            w2=dense(ks[3], F, (F, D)),
            b2=jnp.zeros((1, D), jnp.float32),
            ln1_g=jnp.ones((1, D), jnp.float32),
            ln1_b=jnp.zeros((1, D), jnp.float32),
            ln2_g=jnp.ones((1, D), jnp.float32),
            ln2_b=jnp.zeros((1, D), jnp.float32),
        ))
    return params, key_dim


def vanilla_transformer_forward(params, node_matrix, adj_matrix, pos_embs, *,
                                num_heads, key_dim, identity_bias=0.01,
                                skip_conn=False, row_tile=None):
    """Returns raw, unnormalised class scores (N, num_classes)."""
    N = node_matrix.shape[0]

    # Additive attention mask, built once per forward (0 where edge, -1e30
    # elsewhere), plus the identity (self-attention) bias on the diagonal.
    attn_bias = jnp.where(adj_matrix != 0, 0.0, -1e30).astype(jnp.float32)
    attn_bias = attn_bias + jnp.float32(identity_bias) * jnp.eye(N, dtype=jnp.float32)

    h = embed(node_matrix, pos_embs, params["pre_w"], params["pos_w"],
              params["pos_b"], row_tile=row_tile)

    layer = functools.partial(transformer_layer, num_heads=num_heads,
                              key_dim=key_dim, row_tile=row_tile)
    layers = params["layers"]
    if not skip_conn:
        for p in layers:
            h = layer(h, attn_bias, p)
    else:
        h = layer(h, attn_bias, layers[0])
        for p in layers[1:-1]:
            h = h + layer(h, attn_bias, p)
        h = layer(h, attn_bias, layers[-1])

    return linear(h, params["post_w"], params["post_b"], row_tile=row_tile)


# ---------------------------------------------------------------------------
# Demo
# ---------------------------------------------------------------------------

if __name__ == "__main__":
    N = 16
    input_dim = 8
    num_classes = 4
    internal_dim = 32
    num_layers = 2
    num_heads = 4
    pos_emb_dim = 16
    nonlinear_internal_dim = 64

    key = jax.random.PRNGKey(0)
    kx, kadj, kpos, kp = jax.random.split(key, 4)

    node_matrix = jax.random.normal(kx, (N, input_dim), dtype=jnp.float32)
    pos_embs = jax.random.normal(kpos, (N, pos_emb_dim), dtype=jnp.float32)
    # Random adjacency with self-loops (every node has at least one neighbor).
    adj = (jax.random.uniform(kadj, (N, N)) < 0.3).astype(jnp.float32)
    adj = jnp.maximum(adj, jnp.eye(N, dtype=jnp.float32))

    params, key_dim = init_transformer_params(
        kp, input_dim, num_classes, internal_dim, num_layers, num_heads,
        pos_emb_dim, nonlinear_internal_dim)

    fwd = jax.jit(functools.partial(
        vanilla_transformer_forward,
        num_heads=num_heads, key_dim=key_dim, identity_bias=0.01,
        skip_conn=False, row_tile=None))

    logits = fwd(params, node_matrix, adj, pos_embs)
    jax.block_until_ready(logits)

    assert logits.shape == (N, num_classes), logits.shape
    assert bool(jnp.all(jnp.isfinite(logits)))
    print("KERNEL_OK")
</pallas_src>

<mosaic_0001>
module attributes {stable_mosaic.version = 11 : i64} {
  func.func @_embed_kernel(%arg0: i32, %arg1: memref<16x8xf32, #tpu.memory_space<vmem>>, %arg2: memref<16x16xf32, #tpu.memory_space<vmem>>, %arg3: memref<8x32xf32, #tpu.memory_space<vmem>>, %arg4: memref<16x32xf32, #tpu.memory_space<vmem>>, %arg5: memref<1x32xf32, #tpu.memory_space<vmem>>, %arg6: memref<16x32xf32, #tpu.memory_space<vmem>>) attributes {dimension_semantics = [#tpu.dimension_semantics<parallel>], iteration_bounds = array<i64: 1>, scalar_prefetch = 0 : i64, scratch_operands = 0 : i64, tpu.core_type = #tpu.core_type<tc>, window_params = [{transform_indices = @transform_0, window_bounds = array<i64: 16, 8>}, {transform_indices = @transform_1, window_bounds = array<i64: 16, 16>}, {pipeline_mode = #tpu.pipeline_mode<synchronous>, transform_indices = @transform_2, window_bounds = array<i64: 8, 32>}, {pipeline_mode = #tpu.pipeline_mode<synchronous>, transform_indices = @transform_3, window_bounds = array<i64: 16, 32>}, {pipeline_mode = #tpu.pipeline_mode<synchronous>, transform_indices = @transform_4, window_bounds = array<i64: 1, 32>}, {transform_indices = @transform_5, window_bounds = array<i64: 16, 32>}]} {
    %c0 = arith.constant 0 : index
    %c0_0 = arith.constant 0 : index
    %0 = vector.load %arg1[%c0, %c0_0] : memref<16x8xf32, #tpu.memory_space<vmem>>, vector<16x8xf32>
    %c0_1 = arith.constant 0 : index
    %c0_2 = arith.constant 0 : index
    %1 = vector.load %arg3[%c0_1, %c0_2] : memref<8x32xf32, #tpu.memory_space<vmem>>, vector<8x32xf32>
    %cst = arith.constant dense<0.000000e+00> : vector<16x32xf32>
    %2 = tpu.matmul %0, %1, %cst {dimension_numbers = #tpu.dot_dimension_numbers<[1], [0], [0], [1], [0, 0, 1, 1], [], []>} : vector<16x8xf32>, vector<8x32xf32>, vector<16x32xf32> -> vector<16x32xf32>
    %c0_3 = arith.constant 0 : index
    %c0_4 = arith.constant 0 : index
    %3 = vector.load %arg2[%c0_3, %c0_4] : memref<16x16xf32, #tpu.memory_space<vmem>>, vector<16x16xf32>
    %c0_5 = arith.constant 0 : index
    %c0_6 = arith.constant 0 : index
    %4 = vector.load %arg4[%c0_5, %c0_6] : memref<16x32xf32, #tpu.memory_space<vmem>>, vector<16x32xf32>
    %cst_7 = arith.constant dense<0.000000e+00> : vector<16x32xf32>
    %5 = tpu.matmul %3, %4, %cst_7 {dimension_numbers = #tpu.dot_dimension_numbers<[1], [0], [0], [1], [0, 0, 1, 1], [], []>} : vector<16x16xf32>, vector<16x32xf32>, vector<16x32xf32> -> vector<16x32xf32>
    %6 = arith.addf %2, %5 : vector<16x32xf32>
    %c0_8 = arith.constant 0 : index
    %c0_9 = arith.constant 0 : index
    %7 = vector.load %arg5[%c0_8, %c0_9] : memref<1x32xf32, #tpu.memory_space<vmem>>, vector<1x32xf32>
    %8 = vector.broadcast %7 : vector<1x32xf32> to vector<16x32xf32>
    %9 = arith.addf %6, %8 : vector<16x32xf32>
    %c0_10 = arith.constant 0 : index
    %c0_11 = arith.constant 0 : index
    %10 = vector.load %arg6[%c0_10, %c0_11] : memref<16x32xf32, #tpu.memory_space<vmem>>, vector<16x32xf32>
    tpu.vector_store %arg6[%c0_10, %c0_11], %9 {strides = array<i32>} : memref<16x32xf32, #tpu.memory_space<vmem>>, vector<16x32xf32>,
    return
  }
  func.func @transform_0(%arg0: i32) -> (i32, i32) {
    %c0_i32 = arith.constant 0 : i32
    %c0_i32_0 = arith.constant 0 : i32
    return %arg0, %c0_i32 : i32, i32
  }
  func.func @transform_1(%arg0: i32) -> (i32, i32) {
    %c0_i32 = arith.constant 0 : i32
    %c0_i32_0 = arith.constant 0 : i32
    return %arg0, %c0_i32 : i32, i32
  }
  func.func @transform_2(%arg0: i32) -> (i32, i32) {
    %c0_i32 = arith.constant 0 : i32
    %c0_i32_0 = arith.constant 0 : i32
    %c0_i32_1 = arith.constant 0 : i32
    return %c0_i32, %c0_i32_0 : i32, i32
  }
  func.func @transform_3(%arg0: i32) -> (i32, i32) {
    %c0_i32 = arith.constant 0 : i32
    %c0_i32_0 = arith.constant 0 : i32
    %c0_i32_1 = arith.constant 0 : i32
    return %c0_i32, %c0_i32_0 : i32, i32
  }
  func.func @transform_4(%arg0: i32) -> (i32, i32) {
    %c0_i32 = arith.constant 0 : i32
    %c0_i32_0 = arith.constant 0 : i32
    %c0_i32_1 = arith.constant 0 : i32
    return %c0_i32, %c0_i32_0 : i32, i32
  }
  func.func @transform_5(%arg0: i32) -> (i32, i32) {
    %c0_i32 = arith.constant 0 : i32
    %c0_i32_0 = arith.constant 0 : i32
    return %arg0, %c0_i32 : i32, i32
  }
}

module attributes {stable_mosaic.version = 11 : i64} {
  func.func @_linear_kernel(%arg0: i32, %arg1: memref<16x32xf32, #tpu.memory_space<vmem>>, %arg2: memref<32x4xf32, #tpu.memory_space<vmem>>, %arg3: memref<1x4xf32, #tpu.memory_space<vmem>>, %arg4: memref<16x4xf32, #tpu.memory_space<vmem>>) attributes {dimension_semantics = [#tpu.dimension_semantics<parallel>], iteration_bounds = array<i64: 1>, scalar_prefetch = 0 : i64, scratch_operands = 0 : i64, tpu.core_type = #tpu.core_type<tc>, window_params = [{transform_indices = @transform_0, window_bounds = array<i64: 16, 32>}, {pipeline_mode = #tpu.pipeline_mode<synchronous>, transform_indices = @transform_1, window_bounds = array<i64: 32, 4>}, {pipeline_mode = #tpu.pipeline_mode<synchronous>, transform_indices = @transform_2, window_bounds = array<i64: 1, 4>}, {transform_indices = @transform_3, window_bounds = array<i64: 16, 4>}]} {
    %c0 = arith.constant 0 : index
    %c0_0 = arith.constant 0 : index
    %0 = vector.load %arg1[%c0, %c0_0] : memref<16x32xf32, #tpu.memory_space<vmem>>, vector<16x32xf32>
    %c0_1 = arith.constant 0 : index
    %c0_2 = arith.constant 0 : index
    %1 = vector.load %arg2[%c0_1, %c0_2] : memref<32x4xf32, #tpu.memory_space<vmem>>, vector<32x4xf32>
    %cst = arith.constant dense<0.000000e+00> : vector<16x4xf32>
    %2 = tpu.matmul %0, %1, %cst {dimension_numbers = #tpu.dot_dimension_numbers<[1], [0], [0], [1], [0, 0, 1, 1], [], []>} : vector<16x32xf32>, vector<32x4xf32>, vector<16x4xf32> -> vector<16x4xf32>
    %c0_3 = arith.constant 0 : index
    %c0_4 = arith.constant 0 : index
    %3 = vector.load %arg3[%c0_3, %c0_4] : memref<1x4xf32, #tpu.memory_space<vmem>>, vector<1x4xf32>
    %4 = vector.broadcast %3 : vector<1x4xf32> to vector<16x4xf32>
    %5 = arith.addf %2, %4 : vector<16x4xf32>
    %c0_5 = arith.constant 0 : index
    %c0_6 = arith.constant 0 : index
    %6 = vector.load %arg4[%c0_5, %c0_6] : memref<16x4xf32, #tpu.memory_space<vmem>>, vector<16x4xf32>
    tpu.vector_store %arg4[%c0_5, %c0_6], %5 {strides = array<i32>} : memref<16x4xf32, #tpu.memory_space<vmem>>, vector<16x4xf32>,
    return
  }
  func.func @transform_0(%arg0: i32) -> (i32, i32) {
    %c0_i32 = arith.constant 0 : i32
    %c0_i32_0 = arith.constant 0 : i32
    return %arg0, %c0_i32 : i32, i32
  }
  func.func @transform_1(%arg0: i32) -> (i32, i32) {
    %c0_i32 = arith.constant 0 : i32
    %c0_i32_0 = arith.constant 0 : i32
    %c0_i32_1 = arith.constant 0 : i32
    return %c0_i32, %c0_i32_0 : i32, i32
  }
  func.func @transform_2(%arg0: i32) -> (i32, i32) {
    %c0_i32 = arith.constant 0 : i32
    %c0_i32_0 = arith.constant 0 : i32
    %c0_i32_1 = arith.constant 0 : i32
    return %c0_i32, %c0_i32_0 : i32, i32
  }
  func.func @transform_3(%arg0: i32) -> (i32, i32) {
    %c0_i32 = arith.constant 0 : i32
    %c0_i32_0 = arith.constant 0 : i32
    return %arg0, %c0_i32 : i32, i32
  }
}

module attributes {stable_mosaic.version = 11 : i64} {
  func.func @_transformer_layer_kernel(%arg0: i32, %arg1: memref<16x32xf32, #tpu.memory_space<vmem>>, %arg2: memref<16x32xf32, #tpu.memory_space<vmem>>, %arg3: memref<16x16xf32, #tpu.memory_space<vmem>>, %arg4: memref<32x96xf32, #tpu.memory_space<vmem>>, %arg5: memref<1x96xf32, #tpu.memory_space<vmem>>, %arg6: memref<32x32xf32, #tpu.memory_space<vmem>>, %arg7: memref<1x32xf32, #tpu.memory_space<vmem>>, %arg8: memref<32x64xf32, #tpu.memory_space<vmem>>, %arg9: memref<1x64xf32, #tpu.memory_space<vmem>>, %arg10: memref<64x32xf32, #tpu.memory_space<vmem>>, %arg11: memref<1x32xf32, #tpu.memory_space<vmem>>, %arg12: memref<1x32xf32, #tpu.memory_space<vmem>>, %arg13: memref<1x32xf32, #tpu.memory_space<vmem>>, %arg14: memref<1x32xf32, #tpu.memory_space<vmem>>, %arg15: memref<1x32xf32, #tpu.memory_space<vmem>>, %arg16: memref<16x32xf32, #tpu.memory_space<vmem>>) attributes {dimension_semantics = [#tpu.dimension_semantics<parallel>], iteration_bounds = array<i64: 1>, scalar_prefetch = 0 : i64, scratch_operands = 0 : i64, tpu.core_type = #tpu.core_type<tc>, window_params = [{transform_indices = @transform_0, window_bounds = array<i64: 16, 32>}, {pipeline_mode = #tpu.pipeline_mode<synchronous>, transform_indices = @transform_1, window_bounds = array<i64: 16, 32>}, {transform_indices = @transform_2, window_bounds = array<i64: 16, 16>}, {pipeline_mode = #tpu.pipeline_mode<synchronous>, transform_indices = @transform_3, window_bounds = array<i64: 32, 96>}, {pipeline_mode = #tpu.pipeline_mode<synchronous>, transform_indices = @transform_4, window_bounds = array<i64: 1, 96>}, {pipeline_mode = #tpu.pipeline_mode<synchronous>, transform_indices = @transform_5, window_bounds = array<i64: 32, 32>}, {pipeline_mode = #tpu.pipeline_mode<synchronous>, transform_indices = @transform_6, window_bounds = array<i64: 1, 32>}, {pipeline_mode = #tpu.pipeline_mode<synchronous>, transform_indices = @transform_7, window_bounds = array<i64: 32, 64>}, {pipeline_mode = #tpu.pipeline_mode<synchronous>, transform_indices = @transform_8, window_bounds = array<i64: 1, 64>}, {pipeline_mode = #tpu.pipeline_mode<synchronous>, transform_indices = @transform_9, window_bounds = array<i64: 64, 32>}, {pipeline_mode = #tpu.pipeline_mode<synchronous>, transform_indices = @transform_10, window_bounds = array<i64: 1, 32>}, {pipeline_mode = #tpu.pipeline_mode<synchronous>, transform_indices = @transform_11, window_bounds = array<i64: 1, 32>}, {pipeline_mode = #tpu.pipeline_mode<synchronous>, transform_indices = @transform_12, window_bounds = array<i64: 1, 32>}, {pipeline_mode = #tpu.pipeline_mode<synchronous>, transform_indices = @transform_13, window_bounds = array<i64: 1, 32>}, {pipeline_mode = #tpu.pipeline_mode<synchronous>, transform_indices = @transform_14, window_bounds = array<i64: 1, 32>}, {transform_indices = @transform_15, window_bounds = array<i64: 16, 32>}]} {
    %c0 = arith.constant 0 : index
    %c0_0 = arith.constant 0 : index
    %0 = vector.load %arg1[%c0, %c0_0] : memref<16x32xf32, #tpu.memory_space<vmem>>, vector<16x32xf32>
    %c0_1 = arith.constant 0 : index
    %c0_2 = arith.constant 0 : index
    %1 = vector.load %arg2[%c0_1, %c0_2] : memref<16x32xf32, #tpu.memory_space<vmem>>, vector<16x32xf32>
    %c0_3 = arith.constant 0 : index
    %c0_4 = arith.constant 0 : index
    %2 = vector.load %arg3[%c0_3, %c0_4] : memref<16x16xf32, #tpu.memory_space<vmem>>, vector<16x16xf32>
    %c0_5 = arith.constant 0 : index
    %c0_6 = arith.constant 0 : index
    %3 = vector.load %arg4[%c0_5, %c0_6] : memref<32x96xf32, #tpu.memory_space<vmem>>, vector<32x96xf32>
    %c0_7 = arith.constant 0 : index
    %c0_8 = arith.constant 0 : index
    %4 = vector.load %arg5[%c0_7, %c0_8] : memref<1x96xf32, #tpu.memory_space<vmem>>, vector<1x96xf32>
    %cst = arith.constant dense<0.000000e+00> : vector<16x96xf32>
    %5 = tpu.matmul %1, %3, %cst {dimension_numbers = #tpu.dot_dimension_numbers<[1], [0], [0], [1], [0, 0, 1, 1], [], []>} : vector<16x32xf32>, vector<32x96xf32>, vector<16x96xf32> -> vector<16x96xf32>
    %6 = vector.broadcast %4 : vector<1x96xf32> to vector<16x96xf32>
    %7 = arith.addf %5, %6 : vector<16x96xf32>
    %8 = vector.extract_strided_slice %7 {offsets = [0, 32], sizes = [16, 32], strides = [1, 1]} : vector<16x96xf32> to vector<16x32xf32>
    %9 = vector.extract_strided_slice %7 {offsets = [0, 64], sizes = [16, 32], strides = [1, 1]} : vector<16x96xf32> to vector<16x32xf32>
    %10 = vector.extract_strided_slice %3 {offsets = [0, 0], sizes = [32, 32], strides = [1, 1]} : vector<32x96xf32> to vector<32x32xf32>
    %cst_9 = arith.constant dense<0.000000e+00> : vector<16x32xf32>
    %11 = tpu.matmul %0, %10, %cst_9 {dimension_numbers = #tpu.dot_dimension_numbers<[1], [0], [0], [1], [0, 0, 1, 1], [], []>} : vector<16x32xf32>, vector<32x32xf32>, vector<16x32xf32> -> vector<16x32xf32>
    %12 = vector.extract_strided_slice %4 {offsets = [0, 0], sizes = [1, 32], strides = [1, 1]} : vector<1x96xf32> to vector<1x32xf32>
    %13 = vector.broadcast %12 : vector<1x32xf32> to vector<16x32xf32>
    %14 = arith.addf %11, %13 : vector<16x32xf32>
    %15 = vector.extract_strided_slice %14 {offsets = [0, 0], sizes = [16, 8], strides = [1, 1]} : vector<16x32xf32> to vector<16x8xf32>
    %16 = vector.extract_strided_slice %8 {offsets = [0, 0], sizes = [16, 8], strides = [1, 1]} : vector<16x32xf32> to vector<16x8xf32>
    %17 = vector.extract_strided_slice %9 {offsets = [0, 0], sizes = [16, 8], strides = [1, 1]} : vector<16x32xf32> to vector<16x8xf32>
    %cst_10 = arith.constant dense<0.000000e+00> : vector<16x16xf32>
    %18 = tpu.matmul %15, %16, %cst_10 {dimension_numbers = #tpu.dot_dimension_numbers<[1], [1], [0], [0], [0, 0, 1, 0], [], []>} : vector<16x8xf32>, vector<16x8xf32>, vector<16x16xf32> -> vector<16x16xf32>
    %cst_11 = arith.constant 0.353553385 : f32
    %19 = vector.broadcast %cst_11 : f32 to vector<16x16xf32>
    %20 = arith.mulf %18, %19 : vector<16x16xf32>
    %21 = arith.addf %20, %2 : vector<16x16xf32>
    %cst_12 = arith.constant dense<0xFF800000> : vector<16xf32>
    %22 = vector.multi_reduction <maximumf>, %21, %cst_12 [1] : vector<16x16xf32> to vector<16xf32>
    %23 = vector.shape_cast %22 : vector<16xf32> to vector<16x1xf32>
    %24 = vector.broadcast %23 : vector<16x1xf32> to vector<16x16xf32>
    %25 = arith.subf %21, %24 : vector<16x16xf32>
    %26 = math.exp %25 : vector<16x16xf32>
    %cst_13 = arith.constant dense<0.000000e+00> : vector<16xf32>
    %27 = vector.multi_reduction <add>, %26, %cst_13 [1] : vector<16x16xf32> to vector<16xf32>
    %28 = vector.shape_cast %27 : vector<16xf32> to vector<16x1xf32>
    %29 = tpu.reciprocal %28 {approx = true} : vector<16x1xf32> -> vector<16x1xf32>
    %30 = vector.broadcast %29 : vector<16x1xf32> to vector<16x16xf32>
    %31 = arith.mulf %26, %30 : vector<16x16xf32>
    %cst_14 = arith.constant dense<0.000000e+00> : vector<16x8xf32>
    %32 = tpu.matmul %31, %17, %cst_14 {dimension_numbers = #tpu.dot_dimension_numbers<[1], [0], [0], [1], [0, 0, 1, 1], [], []>} : vector<16x16xf32>, vector<16x8xf32>, vector<16x8xf32> -> vector<16x8xf32>
    %33 = vector.extract_strided_slice %14 {offsets = [0, 8], sizes = [16, 8], strides = [1, 1]} : vector<16x32xf32> to vector<16x8xf32>
    %34 = vector.extract_strided_slice %8 {offsets = [0, 8], sizes = [16, 8], strides = [1, 1]} : vector<16x32xf32> to vector<16x8xf32>
    %35 = vector.extract_strided_slice %9 {offsets = [0, 8], sizes = [16, 8], strides = [1, 1]} : vector<16x32xf32> to vector<16x8xf32>
    %cst_15 = arith.constant dense<0.000000e+00> : vector<16x16xf32>
    %36 = tpu.matmul %33, %34, %cst_15 {dimension_numbers = #tpu.dot_dimension_numbers<[1], [1], [0], [0], [0, 0, 1, 0], [], []>} : vector<16x8xf32>, vector<16x8xf32>, vector<16x16xf32> -> vector<16x16xf32>
    %cst_16 = arith.constant 0.353553385 : f32
    %37 = vector.broadcast %cst_16 : f32 to vector<16x16xf32>
    %38 = arith.mulf %36, %37 : vector<16x16xf32>
    %39 = arith.addf %38, %2 : vector<16x16xf32>
    %cst_17 = arith.constant dense<0xFF800000> : vector<16xf32>
    %40 = vector.multi_reduction <maximumf>, %39, %cst_17 [1] : vector<16x16xf32> to vector<16xf32>
    %41 = vector.shape_cast %40 : vector<16xf32> to vector<16x1xf32>
    %42 = vector.broadcast %41 : vector<16x1xf32> to vector<16x16xf32>
    %43 = arith.subf %39, %42 : vector<16x16xf32>
    %44 = math.exp %43 : vector<16x16xf32>
    %cst_18 = arith.constant dense<0.000000e+00> : vector<16xf32>
    %45 = vector.multi_reduction <add>, %44, %cst_18 [1] : vector<16x16xf32> to vector<16xf32>
    %46 = vector.shape_cast %45 : vector<16xf32> to vector<16x1xf32>
    %47 = tpu.reciprocal %46 {approx = true} : vector<16x1xf32> -> vector<16x1xf32>
    %48 = vector.broadcast %47 : vector<16x1xf32> to vector<16x16xf32>
    %49 = arith.mulf %44, %48 : vector<16x16xf32>
    %cst_19 = arith.constant dense<0.000000e+00> : vector<16x8xf32>
    %50 = tpu.matmul %49, %35, %cst_19 {dimension_numbers = #tpu.dot_dimension_numbers<[1], [0], [0], [1], [0, 0, 1, 1], [], []>} : vector<16x16xf32>, vector<16x8xf32>, vector<16x8xf32> -> vector<16x8xf32>
    %51 = vector.extract_strided_slice %14 {offsets = [0, 16], sizes = [16, 8], strides = [1, 1]} : vector<16x32xf32> to vector<16x8xf32>
    %52 = vector.extract_strided_slice %8 {offsets = [0, 16], sizes = [16, 8], strides = [1, 1]} : vector<16x32xf32> to vector<16x8xf32>
    %53 = vector.extract_strided_slice %9 {offsets = [0, 16], sizes = [16, 8], strides = [1, 1]} : vector<16x32xf32> to vector<16x8xf32>
    %cst_20 = arith.constant dense<0.000000e+00> : vector<16x16xf32>
    %54 = tpu.matmul %51, %52, %cst_20 {dimension_numbers = #tpu.dot_dimension_numbers<[1], [1], [0], [0], [0, 0, 1, 0], [], []>} : vector<16x8xf32>, vector<16x8xf32>, vector<16x16xf32> -> vector<16x16xf32>
    %cst_21 = arith.constant 0.353553385 : f32
    %55 = vector.broadcast %cst_21 : f32 to vector<16x16xf32>
    %56 = arith.mulf %54, %55 : vector<16x16xf32>
    %57 = arith.addf %56, %2 : vector<16x16xf32>
    %cst_22 = arith.constant dense<0xFF800000> : vector<16xf32>
    %58 = vector.multi_reduction <maximumf>, %57, %cst_22 [1] : vector<16x16xf32> to vector<16xf32>
    %59 = vector.shape_cast %58 : vector<16xf32> to vector<16x1xf32>
    %60 = vector.broadcast %59 : vector<16x1xf32> to vector<16x16xf32>
    %61 = arith.subf %57, %60 : vector<16x16xf32>
    %62 = math.exp %61 : vector<16x16xf32>
    %cst_23 = arith.constant dense<0.000000e+00> : vector<16xf32>
    %63 = vector.multi_reduction <add>, %62, %cst_23 [1] : vector<16x16xf32> to vector<16xf32>
    %64 = vector.shape_cast %63 : vector<16xf32> to vector<16x1xf32>
    %65 = tpu.reciprocal %64 {approx = true} : vector<16x1xf32> -> vector<16x1xf32>
    %66 = vector.broadcast %65 : vector<16x1xf32> to vector<16x16xf32>
    %67 = arith.mulf %62, %66 : vector<16x16xf32>
    %cst_24 = arith.constant dense<0.000000e+00> : vector<16x8xf32>
    %68 = tpu.matmul %67, %53, %cst_24 {dimension_numbers = #tpu.dot_dimension_numbers<[1], [0], [0], [1], [0, 0, 1, 1], [], []>} : vector<16x16xf32>, vector<16x8xf32>, vector<16x8xf32> -> vector<16x8xf32>
    %69 = vector.extract_strided_slice %14 {offsets = [0, 24], sizes = [16, 8], strides = [1, 1]} : vector<16x32xf32> to vector<16x8xf32>
    %70 = vector.extract_strided_slice %8 {offsets = [0, 24], sizes = [16, 8], strides = [1, 1]} : vector<16x32xf32> to vector<16x8xf32>
    %71 = vector.extract_strided_slice %9 {offsets = [0, 24], sizes = [16, 8], strides = [1, 1]} : vector<16x32xf32> to vector<16x8xf32>
    %cst_25 = arith.constant dense<0.000000e+00> : vector<16x16xf32>
    %72 = tpu.matmul %69, %70, %cst_25 {dimension_numbers = #tpu.dot_dimension_numbers<[1], [1], [0], [0], [0, 0, 1, 0], [], []>} : vector<16x8xf32>, vector<16x8xf32>, vector<16x16xf32> -> vector<16x16xf32>
    %cst_26 = arith.constant 0.353553385 : f32
    %73 = vector.broadcast %cst_26 : f32 to vector<16x16xf32>
    %74 = arith.mulf %72, %73 : vector<16x16xf32>
    %75 = arith.addf %74, %2 : vector<16x16xf32>
    %cst_27 = arith.constant dense<0xFF800000> : vector<16xf32>
    %76 = vector.multi_reduction <maximumf>, %75, %cst_27 [1] : vector<16x16xf32> to vector<16xf32>
    %77 = vector.shape_cast %76 : vector<16xf32> to vector<16x1xf32>
    %78 = vector.broadcast %77 : vector<16x1xf32> to vector<16x16xf32>
    %79 = arith.subf %75, %78 : vector<16x16xf32>
    %80 = math.exp %79 : vector<16x16xf32>
    %cst_28 = arith.constant dense<0.000000e+00> : vector<16xf32>
    %81 = vector.multi_reduction <add>, %80, %cst_28 [1] : vector<16x16xf32> to vector<16xf32>
    %82 = vector.shape_cast %81 : vector<16xf32> to vector<16x1xf32>
    %83 = tpu.reciprocal %82 {approx = true} : vector<16x1xf32> -> vector<16x1xf32>
    %84 = vector.broadcast %83 : vector<16x1xf32> to vector<16x16xf32>
    %85 = arith.mulf %80, %84 : vector<16x16xf32>
    %cst_29 = arith.constant dense<0.000000e+00> : vector<16x8xf32>
    %86 = tpu.matmul %85, %71, %cst_29 {dimension_numbers = #tpu.dot_dimension_numbers<[1], [0], [0], [1], [0, 0, 1, 1], [], []>} : vector<16x16xf32>, vector<16x8xf32>, vector<16x8xf32> -> vector<16x8xf32>
    %87 = tpu.concatenate %32, %50, %68, %86 in 1 : vector<16x8xf32>, vector<16x8xf32>, vector<16x8xf32>, vector<16x8xf32> -> vector<16x32xf32>
    %c0_30 = arith.constant 0 : index
    %c0_31 = arith.constant 0 : index
    %88 = vector.load %arg6[%c0_30, %c0_31] : memref<32x32xf32, #tpu.memory_space<vmem>>, vector<32x32xf32>
    %cst_32 = arith.constant dense<0.000000e+00> : vector<16x32xf32>
    %89 = tpu.matmul %87, %88, %cst_32 {dimension_numbers = #tpu.dot_dimension_numbers<[1], [0], [0], [1], [0, 0, 1, 1], [], []>} : vector<16x32xf32>, vector<32x32xf32>, vector<16x32xf32> -> vector<16x32xf32>
    %c0_33 = arith.constant 0 : index
    %c0_34 = arith.constant 0 : index
    %90 = vector.load %arg7[%c0_33, %c0_34] : memref<1x32xf32, #tpu.memory_space<vmem>>, vector<1x32xf32>
    %91 = vector.broadcast %90 : vector<1x32xf32> to vector<16x32xf32>
    %92 = arith.addf %89, %91 : vector<16x32xf32>
    %93 = arith.addf %0, %92 : vector<16x32xf32>
    %c0_35 = arith.constant 0 : index
    %c0_36 = arith.constant 0 : index
    %94 = vector.load %arg12[%c0_35, %c0_36] : memref<1x32xf32, #tpu.memory_space<vmem>>, vector<1x32xf32>
    %c0_37 = arith.constant 0 : index
    %c0_38 = arith.constant 0 : index
    %95 = vector.load %arg13[%c0_37, %c0_38] : memref<1x32xf32, #tpu.memory_space<vmem>>, vector<1x32xf32>
    %cst_39 = arith.constant dense<0.000000e+00> : vector<16xf32>
    %96 = vector.multi_reduction <add>, %93, %cst_39 [1] : vector<16x32xf32> to vector<16xf32>
    %97 = vector.shape_cast %96 : vector<16xf32> to vector<16x1xf32>
    %cst_40 = arith.constant 3.200000e+01 : f32
    %98 = vector.broadcast %cst_40 : f32 to vector<16x1xf32>
    %99 = arith.divf %97, %98 : vector<16x1xf32>
    %100 = vector.broadcast %99 : vector<16x1xf32> to vector<16x32xf32>
    %101 = arith.subf %93, %100 : vector<16x32xf32>
    %102 = arith.mulf %101, %101 : vector<16x32xf32>
    %cst_41 = arith.constant dense<0.000000e+00> : vector<16xf32>
    %103 = vector.multi_reduction <add>, %102, %cst_41 [1] : vector<16x32xf32> to vector<16xf32>
    %104 = vector.shape_cast %103 : vector<16xf32> to vector<16x1xf32>
    %cst_42 = arith.constant 3.200000e+01 : f32
    %105 = vector.broadcast %cst_42 : f32 to vector<16x1xf32>
    %106 = arith.divf %104, %105 : vector<16x1xf32>
    %cst_43 = arith.constant 9.99999974E-6 : f32
    %107 = vector.broadcast %cst_43 : f32 to vector<16x1xf32>
    %108 = arith.addf %106, %107 : vector<16x1xf32>
    %109 = math.rsqrt %108 : vector<16x1xf32>
    %110 = vector.broadcast %109 : vector<16x1xf32> to vector<16x32xf32>
    %111 = arith.mulf %101, %110 : vector<16x32xf32>
    %112 = vector.broadcast %94 : vector<1x32xf32> to vector<16x32xf32>
    %113 = arith.mulf %111, %112 : vector<16x32xf32>
    %114 = vector.broadcast %95 : vector<1x32xf32> to vector<16x32xf32>
    %115 = arith.addf %113, %114 : vector<16x32xf32>
    %c0_44 = arith.constant 0 : index
    %c0_45 = arith.constant 0 : index
    %116 = vector.load %arg8[%c0_44, %c0_45] : memref<32x64xf32, #tpu.memory_space<vmem>>, vector<32x64xf32>
    %cst_46 = arith.constant dense<0.000000e+00> : vector<16x64xf32>
    %117 = tpu.matmul %115, %116, %cst_46 {dimension_numbers = #tpu.dot_dimension_numbers<[1], [0], [0], [1], [0, 0, 1, 1], [], []>} : vector<16x32xf32>, vector<32x64xf32>, vector<16x64xf32> -> vector<16x64xf32>
    %c0_47 = arith.constant 0 : index
    %c0_48 = arith.constant 0 : index
    %118 = vector.load %arg9[%c0_47, %c0_48] : memref<1x64xf32, #tpu.memory_space<vmem>>, vector<1x64xf32>
    %119 = vector.broadcast %118 : vector<1x64xf32> to vector<16x64xf32>
    %120 = arith.addf %117, %119 : vector<16x64xf32>
    %cst_49 = arith.constant 0.000000e+00 : f32
    %121 = vector.broadcast %cst_49 : f32 to vector<16x64xf32>
    %122 = arith.maximumf %120, %121 : vector<16x64xf32>
    %c0_50 = arith.constant 0 : index
    %c0_51 = arith.constant 0 : index
    %123 = vector.load %arg10[%c0_50, %c0_51] : memref<64x32xf32, #tpu.memory_space<vmem>>, vector<64x32xf32>
    %cst_52 = arith.constant dense<0.000000e+00> : vector<16x32xf32>
    %124 = tpu.matmul %122, %123, %cst_52 {dimension_numbers = #tpu.dot_dimension_numbers<[1], [0], [0], [1], [0, 0, 1, 1], [], []>} : vector<16x64xf32>, vector<64x32xf32>, vector<16x32xf32> -> vector<16x32xf32>
    %c0_53 = arith.constant 0 : index
    %c0_54 = arith.constant 0 : index
    %125 = vector.load %arg11[%c0_53, %c0_54] : memref<1x32xf32, #tpu.memory_space<vmem>>, vector<1x32xf32>
    %126 = vector.broadcast %125 : vector<1x32xf32> to vector<16x32xf32>
    %127 = arith.addf %124, %126 : vector<16x32xf32>
    %128 = arith.addf %115, %127 : vector<16x32xf32>
    %c0_55 = arith.constant 0 : index
    %c0_56 = arith.constant 0 : index
    %129 = vector.load %arg14[%c0_55, %c0_56] : memref<1x32xf32, #tpu.memory_space<vmem>>, vector<1x32xf32>
    %c0_57 = arith.constant 0 : index
    %c0_58 = arith.constant 0 : index
    %130 = vector.load %arg15[%c0_57, %c0_58] : memref<1x32xf32, #tpu.memory_space<vmem>>, vector<1x32xf32>
    %cst_59 = arith.constant dense<0.000000e+00> : vector<16xf32>
    %131 = vector.multi_reduction <add>, %128, %cst_59 [1] : vector<16x32xf32> to vector<16xf32>
    %132 = vector.shape_cast %131 : vector<16xf32> to vector<16x1xf32>
    %cst_60 = arith.constant 3.200000e+01 : f32
    %133 = vector.broadcast %cst_60 : f32 to vector<16x1xf32>
    %134 = arith.divf %132, %133 : vector<16x1xf32>
    %135 = vector.broadcast %134 : vector<16x1xf32> to vector<16x32xf32>
    %136 = arith.subf %128, %135 : vector<16x32xf32>
    %137 = arith.mulf %136, %136 : vector<16x32xf32>
    %cst_61 = arith.constant dense<0.000000e+00> : vector<16xf32>
    %138 = vector.multi_reduction <add>, %137, %cst_61 [1] : vector<16x32xf32> to vector<16xf32>
    %139 = vector.shape_cast %138 : vector<16xf32> to vector<16x1xf32>
    %cst_62 = arith.constant 3.200000e+01 : f32
    %140 = vector.broadcast %cst_62 : f32 to vector<16x1xf32>
    %141 = arith.divf %139, %140 : vector<16x1xf32>
    %cst_63 = arith.constant 9.99999974E-6 : f32
    %142 = vector.broadcast %cst_63 : f32 to vector<16x1xf32>
    %143 = arith.addf %141, %142 : vector<16x1xf32>
    %144 = math.rsqrt %143 : vector<16x1xf32>
    %145 = vector.broadcast %144 : vector<16x1xf32> to vector<16x32xf32>
    %146 = arith.mulf %136, %145 : vector<16x32xf32>
    %147 = vector.broadcast %129 : vector<1x32xf32> to vector<16x32xf32>
    %148 = arith.mulf %146, %147 : vector<16x32xf32>
    %149 = vector.broadcast %130 : vector<1x32xf32> to vector<16x32xf32>
    %150 = arith.addf %148, %149 : vector<16x32xf32>
    %c0_64 = arith.constant 0 : index
    %c0_65 = arith.constant 0 : index
    %151 = vector.load %arg16[%c0_64, %c0_65] : memref<16x32xf32, #tpu.memory_space<vmem>>, vector<16x32xf32>
    tpu.vector_store %arg16[%c0_64, %c0_65], %150 {strides = array<i32>} : memref<16x32xf32, #tpu.memory_space<vmem>>, vector<16x32xf32>,
    return
  }
  func.func @transform_0(%arg0: i32) -> (i32, i32) {
    %c0_i32 = arith.constant 0 : i32
    %c0_i32_0 = arith.constant 0 : i32
    return %arg0, %c0_i32 : i32, i32
  }
  func.func @transform_1(%arg0: i32) -> (i32, i32) {
    %c0_i32 = arith.constant 0 : i32
    %c0_i32_0 = arith.constant 0 : i32
    %c0_i32_1 = arith.constant 0 : i32
    return %c0_i32, %c0_i32_0 : i32, i32
  }
  func.func @transform_2(%arg0: i32) -> (i32, i32) {
    %c0_i32 = arith.constant 0 : i32
    %c0_i32_0 = arith.constant 0 : i32
    return %arg0, %c0_i32 : i32, i32
  }
  func.func @transform_3(%arg0: i32) -> (i32, i32) {
    %c0_i32 = arith.constant 0 : i32
    %c0_i32_0 = arith.constant 0 : i32
    %c0_i32_1 = arith.constant 0 : i32
    return %c0_i32, %c0_i32_0 : i32, i32
  }
  func.func @transform_4(%arg0: i32) -> (i32, i32) {
    %c0_i32 = arith.constant 0 : i32
    %c0_i32_0 = arith.constant 0 : i32
    %c0_i32_1 = arith.constant 0 : i32
    return %c0_i32, %c0_i32_0 : i32, i32
  }
  func.func @transform_5(%arg0: i32) -> (i32, i32) {
    %c0_i32 = arith.constant 0 : i32
    %c0_i32_0 = arith.constant 0 : i32
    %c0_i32_1 = arith.constant 0 : i32
    return %c0_i32, %c0_i32_0 : i32, i32
  }
  func.func @transform_6(%arg0: i32) -> (i32, i32) {
    %c0_i32 = arith.constant 0 : i32
    %c0_i32_0 = arith.constant 0 : i32
    %c0_i32_1 = arith.constant 0 : i32
    return %c0_i32, %c0_i32_0 : i32, i32
  }
  func.func @transform_7(%arg0: i32) -> (i32, i32) {
    %c0_i32 = arith.constant 0 : i32
    %c0_i32_0 = arith.constant 0 : i32
    %c0_i32_1 = arith.constant 0 : i32
    return %c0_i32, %c0_i32_0 : i32, i32
  }
  func.func @transform_8(%arg0: i32) -> (i32, i32) {
    %c0_i32 = arith.constant 0 : i32
    %c0_i32_0 = arith.constant 0 : i32
    %c0_i32_1 = arith.constant 0 : i32
    return %c0_i32, %c0_i32_0 : i32, i32
  }
  func.func @transform_9(%arg0: i32) -> (i32, i32) {
    %c0_i32 = arith.constant 0 : i32
    %c0_i32_0 = arith.constant 0 : i32
    %c0_i32_1 = arith.constant 0 : i32
    return %c0_i32, %c0_i32_0 : i32, i32
  }
  func.func @transform_10(%arg0: i32) -> (i32, i32) {
    %c0_i32 = arith.constant 0 : i32
    %c0_i32_0 = arith.constant 0 : i32
    %c0_i32_1 = arith.constant 0 : i32
    return %c0_i32, %c0_i32_0 : i32, i32
  }
  func.func @transform_11(%arg0: i32) -> (i32, i32) {
    %c0_i32 = arith.constant 0 : i32
    %c0_i32_0 = arith.constant 0 : i32
    %c0_i32_1 = arith.constant 0 : i32
    return %c0_i32, %c0_i32_0 : i32, i32
  }
  func.func @transform_12(%arg0: i32) -> (i32, i32) {
    %c0_i32 = arith.constant 0 : i32
    %c0_i32_0 = arith.constant 0 : i32
    %c0_i32_1 = arith.constant 0 : i32
    return %c0_i32, %c0_i32_0 : i32, i32
  }
  func.func @transform_13(%arg0: i32) -> (i32, i32) {
    %c0_i32 = arith.constant 0 : i32
    %c0_i32_0 = arith.constant 0 : i32
    %c0_i32_1 = arith.constant 0 : i32
    return %c0_i32, %c0_i32_0 : i32, i32
  }
  func.func @transform_14(%arg0: i32) -> (i32, i32) {
    %c0_i32 = arith.constant 0 : i32
    %c0_i32_0 = arith.constant 0 : i32
    %c0_i32_1 = arith.constant 0 : i32
    return %c0_i32, %c0_i32_0 : i32, i32
  }
  func.func @transform_15(%arg0: i32) -> (i32, i32) {
    %c0_i32 = arith.constant 0 : i32
    %c0_i32_0 = arith.constant 0 : i32
    return %arg0, %c0_i32 : i32, i32
  }
}

</mosaic_0001>

<llo_original>
// kernel: vanilla_transformer_forward.7
$region0: #{vanilla_transformer_forward.7}
  #allocation0 [shape = 'u32[]', space=smem, size = 0x4, offset = 0x4, fixed_abs, tag = 'smem constant byte address 0x4 - core index']
  #allocation1 [shape = 'u32[144,128]{1,0:T(1,128)}', space=vmem, size = 0x12000, scoped, tag = 'internal scratch']
  %s0 = inlined_call_operand.vmem [shape: f32[16,32], index: 0, kind: input, shape index: {}]
  %s1 = inlined_call_operand.vmem [shape: f32[32,4], index: 1, kind: input, shape index: {}]
  %s2 = inlined_call_operand.vmem [shape: f32[1,4], index: 2, kind: input, shape index: {}]
  %s3 = inlined_call_operand.vmem [shape: f32[16,4], index: 3, kind: output, shape index: {}]
  %s4 = sld [smem:[#allocation0]]
  $region22: #{vanilla_transformer_forward.7} parent=0
    _
  %s6 = ssub.s32 1, %s4
  %s7 = scalar_select 0, %s6, %s4
  // Predicated region
  $region2: #{vanilla_transformer_forward.7} parent=0 // pred_check
    _
  $region3: #{vanilla_transformer_forward.7} parent=0 // pred_check_branch
    %9 = sbr.rel (0) target = $region5
  $region4: #{vanilla_transformer_forward.7} parent=0 // pred_region
    _
  $region5: #{vanilla_transformer_forward.7} parent=0 // pred_fallthru
    _
  // Predicated region
  $region6: #{vanilla_transformer_forward.7} parent=0 // pred_check
    _
  $region7: #{vanilla_transformer_forward.7} parent=0 // pred_check_branch
    %11 = sbr.rel (0) target = $region9
  $region8: #{vanilla_transformer_forward.7} parent=0 // pred_region
    _
  $region9: #{vanilla_transformer_forward.7} parent=0 // pred_fallthru
    _
  // Predicated region
  $region10: #{vanilla_transformer_forward.7} parent=0 // pred_check
    _
  $region11: #{vanilla_transformer_forward.7} parent=0 // pred_check_branch
    %13 = sbr.rel (0) target = $region13
  $region12: #{vanilla_transformer_forward.7} parent=0 // pred_region
    _
  $region13: #{vanilla_transformer_forward.7} parent=0 // pred_fallthru
    _
  %v14 = vld [vmem:[%s0] sm:$0xff]
  %v15 = vld [vmem:[%s0 + $0x8] sm:$0xff]
  %v16 = vld [vmem:[%s1] sm:$0xff]
  %v17 = vld [vmem:[%s1 + $0x8] sm:$0xff]
  %v18 = vld [vmem:[%s1 + $0x10] sm:$0xff]
  %v19 = vld [vmem:[%s1 + $0x18] sm:$0xff]
  %v20 = vld [vmem:[%s2] sm:$0x1]
  %v22 = vlaneseq
  %v23 = vshrl.u32 %v22, 7
  %v24 = vsub.s32 0, %v23
  %v25 = vrot.slane %v20, %v24
  %vm27 = vcmask 261120
  %v29 = vsel %vm27, %v14, 0
  %v32 = vsel %vm27, %v15, 0
  %34 = vmatprep.subr.mxu0 0.0
  %35 = vmatpush1.msra.mxu0 0.0
  %36 = vmatprep.subr.mxu0 0.0
  %37 = vmatpush1.msra.mxu0 0.0
  %38 = vmatprep.subr.mxu0 0.0
  %39 = vmatpush1.msra.mxu0 0.0
  %40 = vmatprep.subr.mxu0 0.0
  %41 = vmatpush1.msra.mxu0 0.0
  %42 = vmatprep.subr.mxu0 0.0
  %43 = vmatpush1.msra.mxu0 0.0
  %44 = vmatprep.subr.mxu0 0.0
  %45 = vmatpush1.msra.mxu0 0.0
  %46 = vmatprep.subr.mxu0 0.0
  %47 = vmatpush1.msra.mxu0 0.0
  %48 = vmatprep.subr.mxu0 0.0
  %49 = vmatpush1.msra.mxu0 0.0
  %50 = vmatprep.subr.mxu0 0.0
  %51 = vmatpush1.msra.mxu0 0.0
  %52 = vmatprep.subr.mxu0 0.0
  %53 = vmatpush1.msra.mxu0 0.0
  %54 = vmatprep.subr.mxu0 0.0
  %55 = vmatpush1.msra.mxu0 0.0
  %56 = vmatprep.subr.mxu0 0.0
  %57 = vmatpush1.msra.mxu0 0.0
  %58 = vmatprep.subr.mxu0 0.0
  %59 = vmatpush1.msra.mxu0 %v19
  %60 = vmatprep.subr.mxu0 0.0
  %61 = vmatpush1.msra.mxu0 %v18
  %62 = vmatprep.subr.mxu0 0.0
  %63 = vmatpush1.msra.mxu0 %v17
  %64 = vmatprep.subr.mxu0 0.0
  %65 = vmatpush1.msra.mxu0 %v16
  %66 = vmatprep.subr.mxu0 0.0
  %67 = vmatpush2.msra.mxu0 0.0
  %68 = vmatprep.subr.mxu0 0.0
  %69 = vmatpush2.msra.mxu0 0.0
  %70 = vmatprep.subr.mxu0 0.0
  %71 = vmatpush2.msra.mxu0 0.0
  %72 = vmatprep.subr.mxu0 0.0
  %73 = vmatpush2.msra.mxu0 0.0
  %74 = vmatprep.subr.mxu0 0.0
  %75 = vmatpush2.msra.mxu0 0.0
  %76 = vmatprep.subr.mxu0 0.0
  %77 = vmatpush2.msra.mxu0 0.0
  %78 = vmatprep.subr.mxu0 0.0
  %79 = vmatpush2.msra.mxu0 0.0
  %80 = vmatprep.subr.mxu0 0.0
  %81 = vmatpush2.msra.mxu0 0.0
  %82 = vmatprep.subr.mxu0 0.0
  %83 = vmatpush2.msra.mxu0 0.0
  %84 = vmatprep.subr.mxu0 0.0
  %85 = vmatpush2.msra.mxu0 0.0
  %86 = vmatprep.subr.mxu0 0.0
  %87 = vmatpush2.msra.mxu0 0.0
  %88 = vmatprep.subr.mxu0 0.0
  %89 = vmatpush2.msra.mxu0 0.0
  %90 = vmatprep.subr.mxu0 0.0
  %91 = vmatpush2.msra.mxu0 0.0
  %92 = vmatprep.subr.mxu0 0.0
  %93 = vmatpush2.msra.mxu0 0.0
  %94 = vmatprep.subr.mxu0 0.0
  %95 = vmatpush2.msra.mxu0 0.0
  %96 = vmatprep.subr.mxu0 0.0
  %97 = vmatpush2.msra.mxu0 0.0
  %98 = vmatprep.mubr.f32.mxu0 0.0
  %99 = vmatmul.mubr.f32.gmra.mxu0 %v29
  %v100 = vpop.f32.mrf.mxu0
  %v101 = vadd.f32 %v25, %v100
  %v102 = vpop.f32.mrf.mxu0
  %103 = vmatprep.mubr.f32.mxu0 0.0
  %104 = vmatmul.mubr.f32.gmra.mxu0 %v32
  %v105 = vpop.f32.mrf.mxu0
  %v106 = vadd.f32 %v25, %v105
  %v107 = vpop.f32.mrf.mxu0
  %108 = vdwg.mxu0
  %vm109 = vcmask 31744
  %110 = vst.msk [vmem:[%s3] sm:$0xff] %vm109, %v101
  %111 = vst.msk [vmem:[%s3 + $0x8] sm:$0xff] %vm109, %v106
  // Predicated region
  $region14: #{vanilla_transformer_forward.7} parent=0 // pred_check
    _
  $region15: #{vanilla_transformer_forward.7} parent=0 // pred_check_branch
    %113 = sbr.rel (0) target = $region17
  $region16: #{vanilla_transformer_forward.7} parent=0 // pred_region
    _
  $region17: #{vanilla_transformer_forward.7} parent=0 // pred_fallthru
    _
  // Predicated region
  $region18: #{vanilla_transformer_forward.7} parent=0 // pred_check
    _
  $region19: #{vanilla_transformer_forward.7} parent=0 // pred_check_branch
    %115 = sbr.rel (0) target = $region21
  $region20: #{vanilla_transformer_forward.7} parent=0 // pred_region
    _
  $region21: #{vanilla_transformer_forward.7} parent=0 // pred_fallthru
    _

// kernel: vanilla_transformer_forward.4
$region0: #{vanilla_transformer_forward.4}
  #allocation0 [shape = 'u32[]', space=smem, size = 0x4, offset = 0x4, fixed_abs, tag = 'smem constant byte address 0x4 - core index']
  #allocation1 [shape = 'u32[144,128]{1,0:T(1,128)}', space=vmem, size = 0x12000, scoped, tag = 'internal scratch']
  %s0 = inlined_call_operand.vmem [shape: f32[16,8], index: 0, kind: input, shape index: {}]
  %s1 = inlined_call_operand.vmem [shape: f32[16,16], index: 1, kind: input, shape index: {}]
  %s2 = inlined_call_operand.vmem [shape: f32[8,32], index: 2, kind: input, shape index: {}]
  %s3 = inlined_call_operand.vmem [shape: f32[16,32], index: 3, kind: input, shape index: {}]
  %s4 = inlined_call_operand.vmem [shape: f32[1,32], index: 4, kind: input, shape index: {}]
  %s5 = inlined_call_operand.vmem [shape: f32[16,32], index: 5, kind: output, shape index: {}]
  %s6 = sld [smem:[#allocation0]]
  $region30: #{vanilla_transformer_forward.4} parent=0
    _
  %s8 = ssub.s32 1, %s6
  %s9 = scalar_select 0, %s8, %s6
  // Predicated region
  $region2: #{vanilla_transformer_forward.4} parent=0 // pred_check
    _
  $region3: #{vanilla_transformer_forward.4} parent=0 // pred_check_branch
    %11 = sbr.rel (0) target = $region5
  $region4: #{vanilla_transformer_forward.4} parent=0 // pred_region
    _
  $region5: #{vanilla_transformer_forward.4} parent=0 // pred_fallthru
    _
  // Predicated region
  $region6: #{vanilla_transformer_forward.4} parent=0 // pred_check
    _
  $region7: #{vanilla_transformer_forward.4} parent=0 // pred_check_branch
    %13 = sbr.rel (0) target = $region9
  $region8: #{vanilla_transformer_forward.4} parent=0 // pred_region
    _
  $region9: #{vanilla_transformer_forward.4} parent=0 // pred_fallthru
    _
  // Predicated region
  $region10: #{vanilla_transformer_forward.4} parent=0 // pred_check
    _
  $region11: #{vanilla_transformer_forward.4} parent=0 // pred_check_branch
    %15 = sbr.rel (0) target = $region13
  $region12: #{vanilla_transformer_forward.4} parent=0 // pred_region
    _
  $region13: #{vanilla_transformer_forward.4} parent=0 // pred_fallthru
    _
  // Predicated region
  $region14: #{vanilla_transformer_forward.4} parent=0 // pred_check
    _
  $region15: #{vanilla_transformer_forward.4} parent=0 // pred_check_branch
    %17 = sbr.rel (0) target = $region17
  $region16: #{vanilla_transformer_forward.4} parent=0 // pred_region
    _
  $region17: #{vanilla_transformer_forward.4} parent=0 // pred_fallthru
    _
  // Predicated region
  $region18: #{vanilla_transformer_forward.4} parent=0 // pred_check
    _
  $region19: #{vanilla_transformer_forward.4} parent=0 // pred_check_branch
    %19 = sbr.rel (0) target = $region21
  $region20: #{vanilla_transformer_forward.4} parent=0 // pred_region
    _
  $region21: #{vanilla_transformer_forward.4} parent=0 // pred_fallthru
    _
  %v20 = vld [vmem:[%s0] sm:$0xff]
  %v21 = vld [vmem:[%s0 + $0x8] sm:$0xff]
  %v22 = vld [vmem:[%s2] sm:$0xff]
  %v23 = vld [vmem:[%s1] sm:$0xff]
  %v24 = vld [vmem:[%s1 + $0x8] sm:$0xff]
  %v25 = vld [vmem:[%s3] sm:$0xff]
  %v26 = vld [vmem:[%s3 + $0x8] sm:$0xff]
  %vm27 = vcmask 130048
  %v29 = vsel %vm27, %v23, 0
  %v32 = vsel %vm27, %v24, 0
  %34 = vmatprep.subr.mxu0 0.0
  %35 = vmatpush1.msra.mxu0 0.0
  %36 = vmatprep.subr.mxu0 0.0
  %37 = vmatpush1.msra.mxu0 0.0
  %38 = vmatprep.subr.mxu0 0.0
  %39 = vmatpush1.msra.mxu0 0.0
  %40 = vmatprep.subr.mxu0 0.0
  %41 = vmatpush1.msra.mxu0 0.0
  %42 = vmatprep.subr.mxu0 0.0
  %43 = vmatpush1.msra.mxu0 0.0
  %44 = vmatprep.subr.mxu0 0.0
  %45 = vmatpush1.msra.mxu0 0.0
  %46 = vmatprep.subr.mxu0 0.0
  %47 = vmatpush1.msra.mxu0 0.0
  %48 = vmatprep.subr.mxu0 0.0
  %49 = vmatpush1.msra.mxu0 0.0
  %50 = vmatprep.subr.mxu0 0.0
  %51 = vmatpush1.msra.mxu0 0.0
  %52 = vmatprep.subr.mxu0 0.0
  %53 = vmatpush1.msra.mxu0 0.0
  %54 = vmatprep.subr.mxu0 0.0
  %55 = vmatpush1.msra.mxu0 0.0
  %56 = vmatprep.subr.mxu0 0.0
  %57 = vmatpush1.msra.mxu0 0.0
  %58 = vmatprep.subr.mxu0 0.0
  %59 = vmatpush1.msra.mxu0 0.0
  %60 = vmatprep.subr.mxu0 0.0
  %61 = vmatpush1.msra.mxu0 0.0
  %62 = vmatprep.subr.mxu0 0.0
  %63 = vmatpush1.msra.mxu0 %v26
  %64 = vmatprep.subr.mxu0 0.0
  %65 = vmatpush1.msra.mxu0 %v25
  %66 = vmatprep.subr.mxu0 0.0
  %67 = vmatpush2.msra.mxu0 0.0
  %68 = vmatprep.subr.mxu0 0.0
  %69 = vmatpush2.msra.mxu0 0.0
  %70 = vmatprep.subr.mxu0 0.0
  %71 = vmatpush2.msra.mxu0 0.0
  %72 = vmatprep.subr.mxu0 0.0
  %73 = vmatpush2.msra.mxu0 0.0
  %74 = vmatprep.subr.mxu0 0.0
  %75 = vmatpush2.msra.mxu0 0.0
  %76 = vmatprep.subr.mxu0 0.0
  %77 = vmatpush2.msra.mxu0 0.0
  %78 = vmatprep.subr.mxu0 0.0
  %79 = vmatpush2.msra.mxu0 0.0
  %80 = vmatprep.subr.mxu0 0.0
  %81 = vmatpush2.msra.mxu0 0.0
  %82 = vmatprep.subr.mxu0 0.0
  %83 = vmatpush2.msra.mxu0 0.0
  %84 = vmatprep.subr.mxu0 0.0
  %85 = vmatpush2.msra.mxu0 0.0
  %86 = vmatprep.subr.mxu0 0.0
  %87 = vmatpush2.msra.mxu0 0.0
  %88 = vmatprep.subr.mxu0 0.0
  %89 = vmatpush2.msra.mxu0 0.0
  %90 = vmatprep.subr.mxu0 0.0
  %91 = vmatpush2.msra.mxu0 0.0
  %92 = vmatprep.subr.mxu0 0.0
  %93 = vmatpush2.msra.mxu0 0.0
  %94 = vmatprep.subr.mxu0 0.0
  %95 = vmatpush2.msra.mxu0 0.0
  %96 = vmatprep.subr.mxu0 0.0
  %97 = vmatpush2.msra.mxu0 0.0
  %98 = vmatprep.mubr.f32.mxu0 0.0
  %99 = vmatmul.mubr.f32.gmra.mxu0 %v29
  %v100 = vpop.f32.mrf.mxu0
  %v101 = vadd.f32 0.0, %v100
  %v102 = vpop.f32.mrf.mxu0
  %103 = vmatprep.mubr.f32.mxu0 0.0
  %104 = vmatmul.mubr.f32.gmra.mxu0 %v32
  %v105 = vpop.f32.mrf.mxu0
  %v106 = vadd.f32 0.0, %v105
  %v107 = vpop.f32.mrf.mxu0
  %108 = vdwg.mxu0
  %vm109 = vcmask 64512
  %v111 = vsel %vm109, %v20, 0
  %v114 = vsel %vm109, %v21, 0
  %116 = vmatprep.subr.mxu0 0.0
  %117 = vmatpush1.msra.mxu0 0.0
  %118 = vmatprep.subr.mxu0 0.0
  %119 = vmatpush1.msra.mxu0 0.0
  %120 = vmatprep.subr.mxu0 0.0
  %121 = vmatpush1.msra.mxu0 0.0
  %122 = vmatprep.subr.mxu0 0.0
  %123 = vmatpush1.msra.mxu0 0.0
  %124 = vmatprep.subr.mxu0 0.0
  %125 = vmatpush1.msra.mxu0 0.0
  %126 = vmatprep.subr.mxu0 0.0
  %127 = vmatpush1.msra.mxu0 0.0
  %128 = vmatprep.subr.mxu0 0.0
  %129 = vmatpush1.msra.mxu0 0.0
  %130 = vmatprep.subr.mxu0 0.0
  %131 = vmatpush1.msra.mxu0 0.0
  %132 = vmatprep.subr.mxu0 0.0
  %133 = vmatpush1.msra.mxu0 0.0
  %134 = vmatprep.subr.mxu0 0.0
  %135 = vmatpush1.msra.mxu0 0.0
  %136 = vmatprep.subr.mxu0 0.0
  %137 = vmatpush1.msra.mxu0 0.0
  %138 = vmatprep.subr.mxu0 0.0
  %139 = vmatpush1.msra.mxu0 0.0
  %140 = vmatprep.subr.mxu0 0.0
  %141 = vmatpush1.msra.mxu0 0.0
  %142 = vmatprep.subr.mxu0 0.0
  %143 = vmatpush1.msra.mxu0 0.0
  %144 = vmatprep.subr.mxu0 0.0
  %145 = vmatpush1.msra.mxu0 0.0
  %146 = vmatprep.subr.mxu0 0.0
  %147 = vmatpush1.msra.mxu0 %v22
  %148 = vmatprep.subr.mxu0 0.0
  %149 = vmatpush2.msra.mxu0 0.0
  %150 = vmatprep.subr.mxu0 0.0
  %151 = vmatpush2.msra.mxu0 0.0
  %152 = vmatprep.subr.mxu0 0.0
  %153 = vmatpush2.msra.mxu0 0.0
  %154 = vmatprep.subr.mxu0 0.0
  %155 = vmatpush2.msra.mxu0 0.0
  %156 = vmatprep.subr.mxu0 0.0
  %157 = vmatpush2.msra.mxu0 0.0
  %158 = vmatprep.subr.mxu0 0.0
  %159 = vmatpush2.msra.mxu0 0.0
  %160 = vmatprep.subr.mxu0 0.0
  %161 = vmatpush2.msra.mxu0 0.0
  %162 = vmatprep.subr.mxu0 0.0
  %163 = vmatpush2.msra.mxu0 0.0
  %164 = vmatprep.subr.mxu0 0.0
  %165 = vmatpush2.msra.mxu0 0.0
  %166 = vmatprep.subr.mxu0 0.0
  %167 = vmatpush2.msra.mxu0 0.0
  %168 = vmatprep.subr.mxu0 0.0
  %169 = vmatpush2.msra.mxu0 0.0
  %170 = vmatprep.subr.mxu0 0.0
  %171 = vmatpush2.msra.mxu0 0.0
  %172 = vmatprep.subr.mxu0 0.0
  %173 = vmatpush2.msra.mxu0 0.0
  %174 = vmatprep.subr.mxu0 0.0
  %175 = vmatpush2.msra.mxu0 0.0
  %176 = vmatprep.subr.mxu0 0.0
  %177 = vmatpush2.msra.mxu0 0.0
  %178 = vmatprep.subr.mxu0 0.0
  %179 = vmatpush2.msra.mxu0 0.0
  %180 = vmatprep.mubr.f32.mxu0 0.0
  %181 = vmatmul.mubr.f32.gmra.mxu0 %v111
  %v182 = vpop.f32.mrf.mxu0
  %v183 = vadd.f32 %v101, %v182
  %v184 = vpop.f32.mrf.mxu0
  %185 = vmatprep.mubr.f32.mxu0 0.0
  %186 = vmatmul.mubr.f32.gmra.mxu0 %v114
  %v187 = vpop.f32.mrf.mxu0
  %v188 = vadd.f32 %v106, %v187
  %v189 = vpop.f32.mrf.mxu0
  %190 = vdwg.mxu0
  %v191 = vld [vmem:[%s4] sm:$0x1]
  %v193 = vlaneseq
  %v194 = vshrl.u32 %v193, 7
  %v195 = vsub.s32 0, %v194
  %v196 = vrot.slane %v191, %v195
  %v198 = vadd.f32 %v183, %v196
  %v199 = vadd.f32 %v188, %v196
  %vm200 = vcmask 261120
  %201 = vst.msk [vmem:[%s5] sm:$0xff] %vm200, %v198
  %202 = vst.msk [vmem:[%s5 + $0x8] sm:$0xff] %vm200, %v199
  // Predicated region
  $region22: #{vanilla_transformer_forward.4} parent=0 // pred_check
    _
  $region23: #{vanilla_transformer_forward.4} parent=0 // pred_check_branch
    %204 = sbr.rel (0) target = $region25
  $region24: #{vanilla_transformer_forward.4} parent=0 // pred_region
    _
  $region25: #{vanilla_transformer_forward.4} parent=0 // pred_fallthru
    _
  // Predicated region
  $region26: #{vanilla_transformer_forward.4} parent=0 // pred_check
    _
  $region27: #{vanilla_transformer_forward.4} parent=0 // pred_check_branch
    %206 = sbr.rel (0) target = $region29
  $region28: #{vanilla_transformer_forward.4} parent=0 // pred_region
    _
  $region29: #{vanilla_transformer_forward.4} parent=0 // pred_fallthru
    _

// kernel: vanilla_transformer_forward.5
$region0: #{vanilla_transformer_forward.5}
  #allocation0 [shape = 'u32[]', space=smem, size = 0x4, offset = 0x4, fixed_abs, tag = 'smem constant byte address 0x4 - core index']
  #allocation1 [shape = 'u32[144,128]{1,0:T(1,128)}', space=vmem, size = 0x12000, scoped, tag = 'internal scratch']
  %s0 = inlined_call_operand.vmem [shape: f32[16,32], index: 0, kind: input, shape index: {}, may-alias: {0,1}]
  %s1 = inlined_call_operand.vmem [shape: f32[16,32], index: 1, kind: input, shape index: {}, may-alias: {0,1}]
  %s2 = inlined_call_operand.vmem [shape: f32[16,16], index: 2, kind: input, shape index: {}]
  %s3 = inlined_call_operand.vmem [shape: f32[32,96], index: 3, kind: input, shape index: {}]
  %s4 = inlined_call_operand.vmem [shape: f32[1,96], index: 4, kind: input, shape index: {}]
  %s5 = inlined_call_operand.vmem [shape: f32[32,32], index: 5, kind: input, shape index: {}]
  %s6 = inlined_call_operand.vmem [shape: f32[1,32], index: 6, kind: input, shape index: {}]
  %s7 = inlined_call_operand.vmem [shape: f32[32,64], index: 7, kind: input, shape index: {}]
  %s8 = inlined_call_operand.vmem [shape: f32[1,64], index: 8, kind: input, shape index: {}]
  %s9 = inlined_call_operand.vmem [shape: f32[64,32], index: 9, kind: input, shape index: {}]
  %s10 = inlined_call_operand.vmem [shape: f32[1,32], index: 10, kind: input, shape index: {}]
  %s11 = inlined_call_operand.vmem [shape: f32[1,32], index: 11, kind: input, shape index: {}]
  %s12 = inlined_call_operand.vmem [shape: f32[1,32], index: 12, kind: input, shape index: {}]
  %s13 = inlined_call_operand.vmem [shape: f32[1,32], index: 13, kind: input, shape index: {}]
  %s14 = inlined_call_operand.vmem [shape: f32[1,32], index: 14, kind: input, shape index: {}]
  %s15 = inlined_call_operand.vmem [shape: f32[16,32], index: 15, kind: output, shape index: {}]
  %s16 = sld [smem:[#allocation0]]
  $region70: #{vanilla_transformer_forward.5} parent=0
    _
  %s18 = ssub.s32 1, %s16
  %s19 = scalar_select 0, %s18, %s16
  // Predicated region
  $region2: #{vanilla_transformer_forward.5} parent=0 // pred_check
    _
  $region3: #{vanilla_transformer_forward.5} parent=0 // pred_check_branch
    %21 = sbr.rel (0) target = $region5
  $region4: #{vanilla_transformer_forward.5} parent=0 // pred_region
    _
  $region5: #{vanilla_transformer_forward.5} parent=0 // pred_fallthru
    _
  // Predicated region
  $region6: #{vanilla_transformer_forward.5} parent=0 // pred_check
    _
  $region7: #{vanilla_transformer_forward.5} parent=0 // pred_check_branch
    %23 = sbr.rel (0) target = $region9
  $region8: #{vanilla_transformer_forward.5} parent=0 // pred_region
    _
  $region9: #{vanilla_transformer_forward.5} parent=0 // pred_fallthru
    _
  // Predicated region
  $region10: #{vanilla_transformer_forward.5} parent=0 // pred_check
    _
  $region11: #{vanilla_transformer_forward.5} parent=0 // pred_check_branch
    %25 = sbr.rel (0) target = $region13
  $region12: #{vanilla_transformer_forward.5} parent=0 // pred_region
    _
  $region13: #{vanilla_transformer_forward.5} parent=0 // pred_fallthru
    _
  // Predicated region
  $region14: #{vanilla_transformer_forward.5} parent=0 // pred_check
    _
  $region15: #{vanilla_transformer_forward.5} parent=0 // pred_check_branch
    %27 = sbr.rel (0) target = $region17
  $region16: #{vanilla_transformer_forward.5} parent=0 // pred_region
    _
  $region17: #{vanilla_transformer_forward.5} parent=0 // pred_fallthru
    _
  // Predicated region
  $region18: #{vanilla_transformer_forward.5} parent=0 // pred_check
    _
  $region19: #{vanilla_transformer_forward.5} parent=0 // pred_check_branch
    %29 = sbr.rel (0) target = $region21
  $region20: #{vanilla_transformer_forward.5} parent=0 // pred_region
    _
  $region21: #{vanilla_transformer_forward.5} parent=0 // pred_fallthru
    _
  // Predicated region
  $region22: #{vanilla_transformer_forward.5} parent=0 // pred_check
    _
  $region23: #{vanilla_transformer_forward.5} parent=0 // pred_check_branch
    %31 = sbr.rel (0) target = $region25
  $region24: #{vanilla_transformer_forward.5} parent=0 // pred_region
    _
  $region25: #{vanilla_transformer_forward.5} parent=0 // pred_fallthru
    _
  // Predicated region
  $region26: #{vanilla_transformer_forward.5} parent=0 // pred_check
    _
  $region27: #{vanilla_transformer_forward.5} parent=0 // pred_check_branch
    %33 = sbr.rel (0) target = $region29
  $region28: #{vanilla_transformer_forward.5} parent=0 // pred_region
    _
  $region29: #{vanilla_transformer_forward.5} parent=0 // pred_fallthru
    _
  // Predicated region
  $region30: #{vanilla_transformer_forward.5} parent=0 // pred_check
    _
  $region31: #{vanilla_transformer_forward.5} parent=0 // pred_check_branch
    %35 = sbr.rel (0) target = $region33
  $region32: #{vanilla_transformer_forward.5} parent=0 // pred_region
    _
  $region33: #{vanilla_transformer_forward.5} parent=0 // pred_fallthru
    _
  // Predicated region
  $region34: #{vanilla_transformer_forward.5} parent=0 // pred_check
    _
  $region35: #{vanilla_transformer_forward.5} parent=0 // pred_check_branch
    %37 = sbr.rel (0) target = $region37
  $region36: #{vanilla_transformer_forward.5} parent=0 // pred_region
    _
  $region37: #{vanilla_transformer_forward.5} parent=0 // pred_fallthru
    _
  // Predicated region
  $region38: #{vanilla_transformer_forward.5} parent=0 // pred_check
    _
  $region39: #{vanilla_transformer_forward.5} parent=0 // pred_check_branch
    %39 = sbr.rel (0) target = $region41
  $region40: #{vanilla_transformer_forward.5} parent=0 // pred_region
    _
  $region41: #{vanilla_transformer_forward.5} parent=0 // pred_fallthru
    _
  // Predicated region
  $region42: #{vanilla_transformer_forward.5} parent=0 // pred_check
    _
  $region43: #{vanilla_transformer_forward.5} parent=0 // pred_check_branch
    %41 = sbr.rel (0) target = $region45
  $region44: #{vanilla_transformer_forward.5} parent=0 // pred_region
    _
  $region45: #{vanilla_transformer_forward.5} parent=0 // pred_fallthru
    _
  // Predicated region
  $region46: #{vanilla_transformer_forward.5} parent=0 // pred_check
    _
  $region47: #{vanilla_transformer_forward.5} parent=0 // pred_check_branch
    %43 = sbr.rel (0) target = $region49
  $region48: #{vanilla_transformer_forward.5} parent=0 // pred_region
    _
  $region49: #{vanilla_transformer_forward.5} parent=0 // pred_fallthru
    _
  // Predicated region
  $region50: #{vanilla_transformer_forward.5} parent=0 // pred_check
    _
  $region51: #{vanilla_transformer_forward.5} parent=0 // pred_check_branch
    %45 = sbr.rel (0) target = $region53
  $region52: #{vanilla_transformer_forward.5} parent=0 // pred_region
    _
  $region53: #{vanilla_transformer_forward.5} parent=0 // pred_fallthru
    _
  // Predicated region
  $region54: #{vanilla_transformer_forward.5} parent=0 // pred_check
    _
  $region55: #{vanilla_transformer_forward.5} parent=0 // pred_check_branch
    %47 = sbr.rel (0) target = $region57
  $region56: #{vanilla_transformer_forward.5} parent=0 // pred_region
    _
  $region57: #{vanilla_transformer_forward.5} parent=0 // pred_fallthru
    _
  // Predicated region
  $region58: #{vanilla_transformer_forward.5} parent=0 // pred_check
    _
  $region59: #{vanilla_transformer_forward.5} parent=0 // pred_check_branch
    %49 = sbr.rel (0) target = $region61
  $region60: #{vanilla_transformer_forward.5} parent=0 // pred_region
    _
  $region61: #{vanilla_transformer_forward.5} parent=0 // pred_fallthru
    _
  %v50 = vld [vmem:[%s0] sm:$0xff]
  %v51 = vld [vmem:[%s0 + $0x8] sm:$0xff]
  %v52 = vld [vmem:[%s1] sm:$0xff]
  %v53 = vld [vmem:[%s1 + $0x8] sm:$0xff]
  %v54 = vld [vmem:[%s2] sm:$0xff]
  %v55 = vld [vmem:[%s2 + $0x8] sm:$0xff]
  %v56 = vld [vmem:[%s3] sm:$0xff]
  %v57 = vld [vmem:[%s3 + $0x8] sm:$0xff]
  %v58 = vld [vmem:[%s3 + $0x10] sm:$0xff]
  %v59 = vld [vmem:[%s3 + $0x18] sm:$0xff]
  %v60 = vld [vmem:[%s4] sm:$0x1]
  %v62 = vlaneseq
  %v63 = vshrl.u32 %v62, 7
  %v64 = vsub.s32 0, %v63
  %v65 = vrot.slane %v60, %v64
  %vm67 = vcmask 261120
  %v69 = vsel %vm67, %v52, 0
  %v72 = vsel %vm67, %v53, 0
  %74 = vmatprep.subr.mxu0 0.0
  %75 = vmatpush1.msra.mxu0 0.0
  %76 = vmatprep.subr.mxu0 0.0
  %77 = vmatpush1.msra.mxu0 0.0
  %78 = vmatprep.subr.mxu0 0.0
  %79 = vmatpush1.msra.mxu0 0.0
  %80 = vmatprep.subr.mxu0 0.0
  %81 = vmatpush1.msra.mxu0 0.0
  %82 = vmatprep.subr.mxu0 0.0
  %83 = vmatpush1.msra.mxu0 0.0
  %84 = vmatprep.subr.mxu0 0.0
  %85 = vmatpush1.msra.mxu0 0.0
  %86 = vmatprep.subr.mxu0 0.0
  %87 = vmatpush1.msra.mxu0 0.0
  %88 = vmatprep.subr.mxu0 0.0
  %89 = vmatpush1.msra.mxu0 0.0
  %90 = vmatprep.subr.mxu0 0.0
  %91 = vmatpush1.msra.mxu0 0.0
  %92 = vmatprep.subr.mxu0 0.0
  %93 = vmatpush1.msra.mxu0 0.0
  %94 = vmatprep.subr.mxu0 0.0
  %95 = vmatpush1.msra.mxu0 0.0
  %96 = vmatprep.subr.mxu0 0.0
  %97 = vmatpush1.msra.mxu0 0.0
  %98 = vmatprep.subr.mxu0 0.0
  %99 = vmatpush1.msra.mxu0 %v59
  %100 = vmatprep.subr.mxu0 0.0
  %101 = vmatpush1.msra.mxu0 %v58
  %102 = vmatprep.subr.mxu0 0.0
  %103 = vmatpush1.msra.mxu0 %v57
  %104 = vmatprep.subr.mxu0 0.0
  %105 = vmatpush1.msra.mxu0 %v56
  %106 = vmatprep.subr.mxu0 0.0
  %107 = vmatpush2.msra.mxu0 0.0
  %108 = vmatprep.subr.mxu0 0.0
  %109 = vmatpush2.msra.mxu0 0.0
  %110 = vmatprep.subr.mxu0 0.0
  %111 = vmatpush2.msra.mxu0 0.0
  %112 = vmatprep.subr.mxu0 0.0
  %113 = vmatpush2.msra.mxu0 0.0
  %114 = vmatprep.subr.mxu0 0.0
  %115 = vmatpush2.msra.mxu0 0.0
  %116 = vmatprep.subr.mxu0 0.0
  %117 = vmatpush2.msra.mxu0 0.0
  %118 = vmatprep.subr.mxu0 0.0
  %119 = vmatpush2.msra.mxu0 0.0
  %120 = vmatprep.subr.mxu0 0.0
  %121 = vmatpush2.msra.mxu0 0.0
  %122 = vmatprep.subr.mxu0 0.0
  %123 = vmatpush2.msra.mxu0 0.0
  %124 = vmatprep.subr.mxu0 0.0
  %125 = vmatpush2.msra.mxu0 0.0
  %126 = vmatprep.subr.mxu0 0.0
  %127 = vmatpush2.msra.mxu0 0.0
  %128 = vmatprep.subr.mxu0 0.0
  %129 = vmatpush2.msra.mxu0 0.0
  %130 = vmatprep.subr.mxu0 0.0
  %131 = vmatpush2.msra.mxu0 0.0
  %132 = vmatprep.subr.mxu0 0.0
  %133 = vmatpush2.msra.mxu0 0.0
  %134 = vmatprep.subr.mxu0 0.0
  %135 = vmatpush2.msra.mxu0 0.0
  %136 = vmatprep.subr.mxu0 0.0
  %137 = vmatpush2.msra.mxu0 0.0
  %138 = vmatprep.mubr.f32.mxu0 0.0
  %139 = vmatmul.mubr.f32.gmra.mxu0 %v69
  %v140 = vpop.f32.mrf.mxu0
  %v141 = vadd.f32 %v65, %v140
  %v142 = vpop.f32.mrf.mxu0
  %143 = vmatprep.mubr.f32.mxu0 0.0
  %144 = vmatmul.mubr.f32.gmra.mxu0 %v72
  %v145 = vpop.f32.mrf.mxu0
  %v146 = vadd.f32 %v65, %v145
  %v147 = vpop.f32.mrf.mxu0
  %148 = vdwg.mxu0
  %v150 = vsel %vm67, %v50, 0
  %v153 = vsel %vm67, %v51, 0
  %155 = vmatprep.subr.mxu0 0.0
  %156 = vmatpush1.msra.mxu0 0.0
  %157 = vmatprep.subr.mxu0 0.0
  %158 = vmatpush1.msra.mxu0 0.0
  %159 = vmatprep.subr.mxu0 0.0
  %160 = vmatpush1.msra.mxu0 0.0
  %161 = vmatprep.subr.mxu0 0.0
  %162 = vmatpush1.msra.mxu0 0.0
  %163 = vmatprep.subr.mxu0 0.0
  %164 = vmatpush1.msra.mxu0 0.0
  %165 = vmatprep.subr.mxu0 0.0
  %166 = vmatpush1.msra.mxu0 0.0
  %167 = vmatprep.subr.mxu0 0.0
  %168 = vmatpush1.msra.mxu0 0.0
  %169 = vmatprep.subr.mxu0 0.0
  %170 = vmatpush1.msra.mxu0 0.0
  %171 = vmatprep.subr.mxu0 0.0
  %172 = vmatpush1.msra.mxu0 0.0
  %173 = vmatprep.subr.mxu0 0.0
  %174 = vmatpush1.msra.mxu0 0.0
  %175 = vmatprep.subr.mxu0 0.0
  %176 = vmatpush1.msra.mxu0 0.0
  %177 = vmatprep.subr.mxu0 0.0
  %178 = vmatpush1.msra.mxu0 0.0
  %179 = vmatprep.subr.mxu0 0.0
  %180 = vmatpush1.msra.mxu0 %v59
  %181 = vmatprep.subr.mxu0 0.0
  %182 = vmatpush1.msra.mxu0 %v58
  %183 = vmatprep.subr.mxu0 0.0
  %184 = vmatpush1.msra.mxu0 %v57
  %185 = vmatprep.subr.mxu0 0.0
  %186 = vmatpush1.msra.mxu0 %v56
  %187 = vmatprep.subr.mxu0 0.0
  %188 = vmatpush2.msra.mxu0 0.0
  %189 = vmatprep.subr.mxu0 0.0
  %190 = vmatpush2.msra.mxu0 0.0
  %191 = vmatprep.subr.mxu0 0.0
  %192 = vmatpush2.msra.mxu0 0.0
  %193 = vmatprep.subr.mxu0 0.0
  %194 = vmatpush2.msra.mxu0 0.0
  %195 = vmatprep.subr.mxu0 0.0
  %196 = vmatpush2.msra.mxu0 0.0
  %197 = vmatprep.subr.mxu0 0.0
  %198 = vmatpush2.msra.mxu0 0.0
  %199 = vmatprep.subr.mxu0 0.0
  %200 = vmatpush2.msra.mxu0 0.0
  %201 = vmatprep.subr.mxu0 0.0
  %202 = vmatpush2.msra.mxu0 0.0
  %203 = vmatprep.subr.mxu0 0.0
  %204 = vmatpush2.msra.mxu0 0.0
  %205 = vmatprep.subr.mxu0 0.0
  %206 = vmatpush2.msra.mxu0 0.0
  %207 = vmatprep.subr.mxu0 0.0
  %208 = vmatpush2.msra.mxu0 0.0
  %209 = vmatprep.subr.mxu0 0.0
  %210 = vmatpush2.msra.mxu0 0.0
  %211 = vmatprep.subr.mxu0 0.0
  %212 = vmatpush2.msra.mxu0 0.0
  %213 = vmatprep.subr.mxu0 0.0
  %214 = vmatpush2.msra.mxu0 0.0
  %215 = vmatprep.subr.mxu0 0.0
  %216 = vmatpush2.msra.mxu0 0.0
  %217 = vmatprep.subr.mxu0 0.0
  %218 = vmatpush2.msra.mxu0 0.0
  %219 = vmatprep.mubr.f32.mxu0 0.0
  %220 = vmatmul.mubr.f32.gmra.mxu0 %v150
  %v221 = vpop.f32.mrf.mxu0
  %v222 = vadd.f32 %v65, %v221
  %v223 = vpop.f32.mrf.mxu0
  %224 = vmatprep.mubr.f32.mxu0 0.0
  %225 = vmatmul.mubr.f32.gmra.mxu0 %v153
  %v226 = vpop.f32.mrf.mxu0
  %v227 = vadd.f32 %v65, %v226
  %v228 = vpop.f32.mrf.mxu0
  %229 = vdwg.mxu0
  %232 = vrot.lane.b32.xlu0 %v141, 96
  %v233 = vpop.permute.xlu0 %232
  %234 = vrot.lane.b32.xlu0 %v146, 96
  %v235 = vpop.permute.xlu0 %234
  %vm236 = vcmask 64512
  %v238 = vsel %vm236, %v222, 0
  %v241 = vsel %vm236, %v227, 0
  %v243 = vsel %vm236, %v233, 0
  %v245 = vsel %vm236, %v235, 0
  %247 = vmatprep.subr.mxu0 0.0
  %248 = vmatpush1.xpose.msra.mxu0 0.0
  %249 = vmatprep.subr.mxu0 0.0
  %250 = vmatpush1.xpose.msra.mxu0 0.0
  %251 = vmatprep.subr.mxu0 0.0
  %252 = vmatpush1.xpose.msra.mxu0 0.0
  %253 = vmatprep.subr.mxu0 0.0
  %254 = vmatpush1.xpose.msra.mxu0 0.0
  %255 = vmatprep.subr.mxu0 0.0
  %256 = vmatpush1.xpose.msra.mxu0 0.0
  %257 = vmatprep.subr.mxu0 0.0
  %258 = vmatpush1.xpose.msra.mxu0 0.0
  %259 = vmatprep.subr.mxu0 0.0
  %260 = vmatpush1.xpose.msra.mxu0 0.0
  %261 = vmatprep.subr.mxu0 0.0
  %262 = vmatpush1.xpose.msra.mxu0 0.0
  %263 = vmatprep.subr.mxu0 0.0
  %264 = vmatpush1.xpose.msra.mxu0 0.0
  %265 = vmatprep.subr.mxu0 0.0
  %266 = vmatpush1.xpose.msra.mxu0 0.0
  %267 = vmatprep.subr.mxu0 0.0
  %268 = vmatpush1.xpose.msra.mxu0 0.0
  %269 = vmatprep.subr.mxu0 0.0
  %270 = vmatpush1.xpose.msra.mxu0 0.0
  %271 = vmatprep.subr.mxu0 0.0
  %272 = vmatpush1.xpose.msra.mxu0 0.0
  %273 = vmatprep.subr.mxu0 0.0
  %274 = vmatpush1.xpose.msra.mxu0 0.0
  %275 = vmatprep.subr.mxu0 0.0
  %276 = vmatpush1.xpose.msra.mxu0 %v245
  %277 = vmatprep.subr.mxu0 0.0
  %278 = vmatpush1.xpose.msra.mxu0 %v243
  %279 = vmatprep.subr.mxu0 0.0
  %280 = vmatpush2.xpose.msra.mxu0 0.0
  %281 = vmatprep.subr.mxu0 0.0
  %282 = vmatpush2.xpose.msra.mxu0 0.0
  %283 = vmatprep.subr.mxu0 0.0
  %284 = vmatpush2.xpose.msra.mxu0 0.0
  %285 = vmatprep.subr.mxu0 0.0
  %286 = vmatpush2.xpose.msra.mxu0 0.0
  %287 = vmatprep.subr.mxu0 0.0
  %288 = vmatpush2.xpose.msra.mxu0 0.0
  %289 = vmatprep.subr.mxu0 0.0
  %290 = vmatpush2.xpose.msra.mxu0 0.0
  %291 = vmatprep.subr.mxu0 0.0
  %292 = vmatpush2.xpose.msra.mxu0 0.0
  %293 = vmatprep.subr.mxu0 0.0
  %294 = vmatpush2.xpose.msra.mxu0 0.0
  %295 = vmatprep.subr.mxu0 0.0
  %296 = vmatpush2.xpose.msra.mxu0 0.0
  %297 = vmatprep.subr.mxu0 0.0
  %298 = vmatpush2.xpose.msra.mxu0 0.0
  %299 = vmatprep.subr.mxu0 0.0
  %300 = vmatpush2.xpose.msra.mxu0 0.0
  %301 = vmatprep.subr.mxu0 0.0
  %302 = vmatpush2.xpose.msra.mxu0 0.0
  %303 = vmatprep.subr.mxu0 0.0
  %304 = vmatpush2.xpose.msra.mxu0 0.0
  %305 = vmatprep.subr.mxu0 0.0
  %306 = vmatpush2.xpose.msra.mxu0 0.0
  %307 = vmatprep.subr.mxu0 0.0
  %308 = vmatpush2.xpose.msra.mxu0 0.0
  %309 = vmatprep.subr.mxu0 0.0
  %310 = vmatpush2.xpose.msra.mxu0 0.0
  %311 = vmatprep.mubr.f32.mxu0 0.0
  %312 = vmatmul.mubr.f32.gmra.mxu0 %v238
  %v313 = vpop.f32.mrf.mxu0
  %v314 = vadd.f32 0.0, %v313
  %v315 = vpop.f32.mrf.mxu0
  %316 = vmatprep.mubr.f32.mxu0 0.0
  %317 = vmatmul.mubr.f32.gmra.mxu0 %v241
  %v318 = vpop.f32.mrf.mxu0
  %v319 = vadd.f32 0.0, %v318
  %v320 = vpop.f32.mrf.mxu0
  %321 = vdwg.mxu0
  %v322 = vmul.f32 %v314, 0.35355338
  %v323 = vmul.f32 %v319, 0.35355338
  %v324 = vadd.f32 %v322, %v54
  %v325 = vadd.f32 %v323, %v55
  %vm326 = vcmask 130048
  %v327 = vsel %vm326, %v324, -inf
  %328 = vmax.xlane.f32.xlu0 %v327
  %v329 = vpop.xlane.xlu0 %328
  %v330 = vsel %vm326, %v325, -inf
  %331 = vmax.xlane.f32.xlu0 %v330
  %v332 = vpop.xlane.xlu0 %331
  %v333 = vsub.f32 %v324, %v329
  %v334 = vsub.f32 %v325, %v332
  %v335 = vmul.f32 %v333, 1.442695
  %v336 = vpow.pop %v335
  %v337 = vmul.f32 %v334, 1.442695
  %v338 = vpow.pop %v337
  %v339 = vsel %vm326, %v336, 0.0
  %340 = vadd.xlane.f32.xlu0 %v339
  %v341 = vpop.xlane.xlu0 %340
  %v342 = vsel %vm326, %v338, 0.0
  %343 = vadd.xlane.f32.xlu0 %v342
  %v344 = vpop.xlane.xlu0 %343
  %v345 = vrcp.pop %v341
  %v346 = vrcp.pop %v344
  %v347 = vmul.f32 %v336, %v345
  %v348 = vmul.f32 %v338, %v346
  %349 = vrot.lane.b32.xlu0 %v141, 64
  %v350 = vpop.permute.xlu0 %349
  %351 = vrot.lane.b32.xlu0 %v146, 64
  %v352 = vpop.permute.xlu0 %351
  %v356 = vsel %vm326, %v347, 0
  %v359 = vsel %vm326, %v348, 0
  %361 = vmatprep.subr.mxu0 0.0
  %362 = vmatpush1.msra.mxu0 0.0
  %363 = vmatprep.subr.mxu0 0.0
  %364 = vmatpush1.msra.mxu0 0.0
  %365 = vmatprep.subr.mxu0 0.0
  %366 = vmatpush1.msra.mxu0 0.0
  %367 = vmatprep.subr.mxu0 0.0
  %368 = vmatpush1.msra.mxu0 0.0
  %369 = vmatprep.subr.mxu0 0.0
  %370 = vmatpush1.msra.mxu0 0.0
  %371 = vmatprep.subr.mxu0 0.0
  %372 = vmatpush1.msra.mxu0 0.0
  %373 = vmatprep.subr.mxu0 0.0
  %374 = vmatpush1.msra.mxu0 0.0
  %375 = vmatprep.subr.mxu0 0.0
  %376 = vmatpush1.msra.mxu0 0.0
  %377 = vmatprep.subr.mxu0 0.0
  %378 = vmatpush1.msra.mxu0 0.0
  %379 = vmatprep.subr.mxu0 0.0
  %380 = vmatpush1.msra.mxu0 0.0
  %381 = vmatprep.subr.mxu0 0.0
  %382 = vmatpush1.msra.mxu0 0.0
  %383 = vmatprep.subr.mxu0 0.0
  %384 = vmatpush1.msra.mxu0 0.0
  %385 = vmatprep.subr.mxu0 0.0
  %386 = vmatpush1.msra.mxu0 0.0
  %387 = vmatprep.subr.mxu0 0.0
  %388 = vmatpush1.msra.mxu0 0.0
  %389 = vmatprep.subr.mxu0 0.0
  %390 = vmatpush1.msra.mxu0 %v352
  %391 = vmatprep.subr.mxu0 0.0
  %392 = vmatpush1.msra.mxu0 %v350
  %393 = vmatprep.subr.mxu0 0.0
  %394 = vmatpush2.msra.mxu0 0.0
  %395 = vmatprep.subr.mxu0 0.0
  %396 = vmatpush2.msra.mxu0 0.0
  %397 = vmatprep.subr.mxu0 0.0
  %398 = vmatpush2.msra.mxu0 0.0
  %399 = vmatprep.subr.mxu0 0.0
  %400 = vmatpush2.msra.mxu0 0.0
  %401 = vmatprep.subr.mxu0 0.0
  %402 = vmatpush2.msra.mxu0 0.0
  %403 = vmatprep.subr.mxu0 0.0
  %404 = vmatpush2.msra.mxu0 0.0
  %405 = vmatprep.subr.mxu0 0.0
  %406 = vmatpush2.msra.mxu0 0.0
  %407 = vmatprep.subr.mxu0 0.0
  %408 = vmatpush2.msra.mxu0 0.0
  %409 = vmatprep.subr.mxu0 0.0
  %410 = vmatpush2.msra.mxu0 0.0
  %411 = vmatprep.subr.mxu0 0.0
  %412 = vmatpush2.msra.mxu0 0.0
  %413 = vmatprep.subr.mxu0 0.0
  %414 = vmatpush2.msra.mxu0 0.0
  %415 = vmatprep.subr.mxu0 0.0
  %416 = vmatpush2.msra.mxu0 0.0
  %417 = vmatprep.subr.mxu0 0.0
  %418 = vmatpush2.msra.mxu0 0.0
  %419 = vmatprep.subr.mxu0 0.0
  %420 = vmatpush2.msra.mxu0 0.0
  %421 = vmatprep.subr.mxu0 0.0
  %422 = vmatpush2.msra.mxu0 0.0
  %423 = vmatprep.subr.mxu0 0.0
  %424 = vmatpush2.msra.mxu0 0.0
  %425 = vmatprep.mubr.f32.mxu0 0.0
  %426 = vmatmul.mubr.f32.gmra.mxu0 %v356
  %v427 = vpop.f32.mrf.mxu0
  %v428 = vadd.f32 0.0, %v427
  %v429 = vpop.f32.mrf.mxu0
  %430 = vmatprep.mubr.f32.mxu0 0.0
  %431 = vmatmul.mubr.f32.gmra.mxu0 %v359
  %v432 = vpop.f32.mrf.mxu0
  %v433 = vadd.f32 0.0, %v432
  %v434 = vpop.f32.mrf.mxu0
  %435 = vdwg.mxu0
  %436 = vrot.lane.b32.xlu0 %v222, 120
  %v437 = vpop.permute.xlu0 %436
  %438 = vrot.lane.b32.xlu0 %v227, 120
  %v439 = vpop.permute.xlu0 %438
  %440 = vrot.lane.b32.xlu0 %v141, 88
  %v441 = vpop.permute.xlu0 %440
  %442 = vrot.lane.b32.xlu0 %v146, 88
  %v443 = vpop.permute.xlu0 %442
  %v444 = vsel %vm236, %v437, 0
  %v446 = vsel %vm236, %v439, 0
  %v448 = vsel %vm236, %v441, 0
  %v450 = vsel %vm236, %v443, 0
  %452 = vmatprep.subr.mxu0 0.0
  %453 = vmatpush1.xpose.msra.mxu0 0.0
  %454 = vmatprep.subr.mxu0 0.0
  %455 = vmatpush1.xpose.msra.mxu0 0.0
  %456 = vmatprep.subr.mxu0 0.0
  %457 = vmatpush1.xpose.msra.mxu0 0.0
  %458 = vmatprep.subr.mxu0 0.0
  %459 = vmatpush1.xpose.msra.mxu0 0.0
  %460 = vmatprep.subr.mxu0 0.0
  %461 = vmatpush1.xpose.msra.mxu0 0.0
  %462 = vmatprep.subr.mxu0 0.0
  %463 = vmatpush1.xpose.msra.mxu0 0.0
  %464 = vmatprep.subr.mxu0 0.0
  %465 = vmatpush1.xpose.msra.mxu0 0.0
  %466 = vmatprep.subr.mxu0 0.0
  %467 = vmatpush1.xpose.msra.mxu0 0.0
  %468 = vmatprep.subr.mxu0 0.0
  %469 = vmatpush1.xpose.msra.mxu0 0.0
  %470 = vmatprep.subr.mxu0 0.0
  %471 = vmatpush1.xpose.msra.mxu0 0.0
  %472 = vmatprep.subr.mxu0 0.0
  %473 = vmatpush1.xpose.msra.mxu0 0.0
  %474 = vmatprep.subr.mxu0 0.0
  %475 = vmatpush1.xpose.msra.mxu0 0.0
  %476 = vmatprep.subr.mxu0 0.0
  %477 = vmatpush1.xpose.msra.mxu0 0.0
  %478 = vmatprep.subr.mxu0 0.0
  %479 = vmatpush1.xpose.msra.mxu0 0.0
  %480 = vmatprep.subr.mxu0 0.0
  %481 = vmatpush1.xpose.msra.mxu0 %v450
  %482 = vmatprep.subr.mxu0 0.0
  %483 = vmatpush1.xpose.msra.mxu0 %v448
  %484 = vmatprep.subr.mxu0 0.0
  %485 = vmatpush2.xpose.msra.mxu0 0.0
  %486 = vmatprep.subr.mxu0 0.0
  %487 = vmatpush2.xpose.msra.mxu0 0.0
  %488 = vmatprep.subr.mxu0 0.0
  %489 = vmatpush2.xpose.msra.mxu0 0.0
  %490 = vmatprep.subr.mxu0 0.0
  %491 = vmatpush2.xpose.msra.mxu0 0.0
  %492 = vmatprep.subr.mxu0 0.0
  %493 = vmatpush2.xpose.msra.mxu0 0.0
  %494 = vmatprep.subr.mxu0 0.0
  %495 = vmatpush2.xpose.msra.mxu0 0.0
  %496 = vmatprep.subr.mxu0 0.0
  %497 = vmatpush2.xpose.msra.mxu0 0.0
  %498 = vmatprep.subr.mxu0 0.0
  %499 = vmatpush2.xpose.msra.mxu0 0.0
  %500 = vmatprep.subr.mxu0 0.0
  %501 = vmatpush2.xpose.msra.mxu0 0.0
  %502 = vmatprep.subr.mxu0 0.0
  %503 = vmatpush2.xpose.msra.mxu0 0.0
  %504 = vmatprep.subr.mxu0 0.0
  %505 = vmatpush2.xpose.msra.mxu0 0.0
  %506 = vmatprep.subr.mxu0 0.0
  %507 = vmatpush2.xpose.msra.mxu0 0.0
  %508 = vmatprep.subr.mxu0 0.0
  %509 = vmatpush2.xpose.msra.mxu0 0.0
  %510 = vmatprep.subr.mxu0 0.0
  %511 = vmatpush2.xpose.msra.mxu0 0.0
  %512 = vmatprep.subr.mxu0 0.0
  %513 = vmatpush2.xpose.msra.mxu0 0.0
  %514 = vmatprep.subr.mxu0 0.0
  %515 = vmatpush2.xpose.msra.mxu0 0.0
  %516 = vmatprep.mubr.f32.mxu0 0.0
  %517 = vmatmul.mubr.f32.gmra.mxu0 %v444
  %v518 = vpop.f32.mrf.mxu0
  %v519 = vadd.f32 0.0, %v518
  %v520 = vpop.f32.mrf.mxu0
  %521 = vmatprep.mubr.f32.mxu0 0.0
  %522 = vmatmul.mubr.f32.gmra.mxu0 %v446
  %v523 = vpop.f32.mrf.mxu0
  %v524 = vadd.f32 0.0, %v523
  %v525 = vpop.f32.mrf.mxu0
  %526 = vdwg.mxu0
  %v527 = vmul.f32 %v519, 0.35355338
  %v528 = vmul.f32 %v524, 0.35355338
  %v529 = vadd.f32 %v527, %v54
  %v530 = vadd.f32 %v528, %v55
  %v531 = vsel %vm326, %v529, -inf
  %532 = vmax.xlane.f32.xlu0 %v531
  %v533 = vpop.xlane.xlu0 %532
  %v534 = vsel %vm326, %v530, -inf
  %535 = vmax.xlane.f32.xlu0 %v534
  %v536 = vpop.xlane.xlu0 %535
  %v537 = vsub.f32 %v529, %v533
  %v538 = vsub.f32 %v530, %v536
  %v539 = vmul.f32 %v537, 1.442695
  %v540 = vpow.pop %v539
  %v541 = vmul.f32 %v538, 1.442695
  %v542 = vpow.pop %v541
  %v543 = vsel %vm326, %v540, 0.0
  %544 = vadd.xlane.f32.xlu0 %v543
  %v545 = vpop.xlane.xlu0 %544
  %v546 = vsel %vm326, %v542, 0.0
  %547 = vadd.xlane.f32.xlu0 %v546
  %v548 = vpop.xlane.xlu0 %547
  %v549 = vrcp.pop %v545
  %v550 = vrcp.pop %v548
  %v551 = vmul.f32 %v540, %v549
  %v552 = vmul.f32 %v542, %v550
  %553 = vrot.lane.b32.xlu0 %v141, 56
  %v554 = vpop.permute.xlu0 %553
  %555 = vrot.lane.b32.xlu0 %v146, 56
  %v556 = vpop.permute.xlu0 %555
  %v560 = vsel %vm326, %v551, 0
  %v563 = vsel %vm326, %v552, 0
  %565 = vmatprep.subr.mxu0 0.0
  %566 = vmatpush1.msra.mxu0 0.0
  %567 = vmatprep.subr.mxu0 0.0
  %568 = vmatpush1.msra.mxu0 0.0
  %569 = vmatprep.subr.mxu0 0.0
  %570 = vmatpush1.msra.mxu0 0.0
  %571 = vmatprep.subr.mxu0 0.0
  %572 = vmatpush1.msra.mxu0 0.0
  %573 = vmatprep.subr.mxu0 0.0
  %574 = vmatpush1.msra.mxu0 0.0
  %575 = vmatprep.subr.mxu0 0.0
  %576 = vmatpush1.msra.mxu0 0.0
  %577 = vmatprep.subr.mxu0 0.0
  %578 = vmatpush1.msra.mxu0 0.0
  %579 = vmatprep.subr.mxu0 0.0
  %580 = vmatpush1.msra.mxu0 0.0
  %581 = vmatprep.subr.mxu0 0.0
  %582 = vmatpush1.msra.mxu0 0.0
  %583 = vmatprep.subr.mxu0 0.0
  %584 = vmatpush1.msra.mxu0 0.0
  %585 = vmatprep.subr.mxu0 0.0
  %586 = vmatpush1.msra.mxu0 0.0
  %587 = vmatprep.subr.mxu0 0.0
  %588 = vmatpush1.msra.mxu0 0.0
  %589 = vmatprep.subr.mxu0 0.0
  %590 = vmatpush1.msra.mxu0 0.0
  %591 = vmatprep.subr.mxu0 0.0
  %592 = vmatpush1.msra.mxu0 0.0
  %593 = vmatprep.subr.mxu0 0.0
  %594 = vmatpush1.msra.mxu0 %v556
  %595 = vmatprep.subr.mxu0 0.0
  %596 = vmatpush1.msra.mxu0 %v554
  %597 = vmatprep.subr.mxu0 0.0
  %598 = vmatpush2.msra.mxu0 0.0
  %599 = vmatprep.subr.mxu0 0.0
  %600 = vmatpush2.msra.mxu0 0.0
  %601 = vmatprep.subr.mxu0 0.0
  %602 = vmatpush2.msra.mxu0 0.0
  %603 = vmatprep.subr.mxu0 0.0
  %604 = vmatpush2.msra.mxu0 0.0
  %605 = vmatprep.subr.mxu0 0.0
  %606 = vmatpush2.msra.mxu0 0.0
  %607 = vmatprep.subr.mxu0 0.0
  %608 = vmatpush2.msra.mxu0 0.0
  %609 = vmatprep.subr.mxu0 0.0
  %610 = vmatpush2.msra.mxu0 0.0
  %611 = vmatprep.subr.mxu0 0.0
  %612 = vmatpush2.msra.mxu0 0.0
  %613 = vmatprep.subr.mxu0 0.0
  %614 = vmatpush2.msra.mxu0 0.0
  %615 = vmatprep.subr.mxu0 0.0
  %616 = vmatpush2.msra.mxu0 0.0
  %617 = vmatprep.subr.mxu0 0.0
  %618 = vmatpush2.msra.mxu0 0.0
  %619 = vmatprep.subr.mxu0 0.0
  %620 = vmatpush2.msra.mxu0 0.0
  %621 = vmatprep.subr.mxu0 0.0
  %622 = vmatpush2.msra.mxu0 0.0
  %623 = vmatprep.subr.mxu0 0.0
  %624 = vmatpush2.msra.mxu0 0.0
  %625 = vmatprep.subr.mxu0 0.0
  %626 = vmatpush2.msra.mxu0 0.0
  %627 = vmatprep.subr.mxu0 0.0
  %628 = vmatpush2.msra.mxu0 0.0
  %629 = vmatprep.mubr.f32.mxu0 0.0
  %630 = vmatmul.mubr.f32.gmra.mxu0 %v560
  %v631 = vpop.f32.mrf.mxu0
  %v632 = vadd.f32 0.0, %v631
  %v633 = vpop.f32.mrf.mxu0
  %634 = vmatprep.mubr.f32.mxu0 0.0
  %635 = vmatmul.mubr.f32.gmra.mxu0 %v563
  %v636 = vpop.f32.mrf.mxu0
  %v637 = vadd.f32 0.0, %v636
  %v638 = vpop.f32.mrf.mxu0
  %639 = vdwg.mxu0
  %640 = vrot.lane.b32.xlu0 %v222, 112
  %v641 = vpop.permute.xlu0 %640
  %642 = vrot.lane.b32.xlu0 %v227, 112
  %v643 = vpop.permute.xlu0 %642
  %644 = vrot.lane.b32.xlu0 %v141, 80
  %v645 = vpop.permute.xlu0 %644
  %646 = vrot.lane.b32.xlu0 %v146, 80
  %v647 = vpop.permute.xlu0 %646
  %v648 = vsel %vm236, %v641, 0
  %v650 = vsel %vm236, %v643, 0
  %v652 = vsel %vm236, %v645, 0
  %v654 = vsel %vm236, %v647, 0
  %656 = vmatprep.subr.mxu0 0.0
  %657 = vmatpush1.xpose.msra.mxu0 0.0
  %658 = vmatprep.subr.mxu0 0.0
  %659 = vmatpush1.xpose.msra.mxu0 0.0
  %660 = vmatprep.subr.mxu0 0.0
  %661 = vmatpush1.xpose.msra.mxu0 0.0
  %662 = vmatprep.subr.mxu0 0.0
  %663 = vmatpush1.xpose.msra.mxu0 0.0
  %664 = vmatprep.subr.mxu0 0.0
  %665 = vmatpush1.xpose.msra.mxu0 0.0
  %666 = vmatprep.subr.mxu0 0.0
  %667 = vmatpush1.xpose.msra.mxu0 0.0
  %668 = vmatprep.subr.mxu0 0.0
  %669 = vmatpush1.xpose.msra.mxu0 0.0
  %670 = vmatprep.subr.mxu0 0.0
  %671 = vmatpush1.xpose.msra.mxu0 0.0
  %672 = vmatprep.subr.mxu0 0.0
  %673 = vmatpush1.xpose.msra.mxu0 0.0
  %674 = vmatprep.subr.mxu0 0.0
  %675 = vmatpush1.xpose.msra.mxu0 0.0
  %676 = vmatprep.subr.mxu0 0.0
  %677 = vmatpush1.xpose.msra.mxu0 0.0
  %678 = vmatprep.subr.mxu0 0.0
  %679 = vmatpush1.xpose.msra.mxu0 0.0
  %680 = vmatprep.subr.mxu0 0.0
  %681 = vmatpush1.xpose.msra.mxu0 0.0
  %682 = vmatprep.subr.mxu0 0.0
  %683 = vmatpush1.xpose.msra.mxu0 0.0
  %684 = vmatprep.subr.mxu0 0.0
  %685 = vmatpush1.xpose.msra.mxu0 %v654
  %686 = vmatprep.subr.mxu0 0.0
  %687 = vmatpush1.xpose.msra.mxu0 %v652
  %688 = vmatprep.subr.mxu0 0.0
  %689 = vmatpush2.xpose.msra.mxu0 0.0
  %690 = vmatprep.subr.mxu0 0.0
  %691 = vmatpush2.xpose.msra.mxu0 0.0
  %692 = vmatprep.subr.mxu0 0.0
  %693 = vmatpush2.xpose.msra.mxu0 0.0
  %694 = vmatprep.subr.mxu0 0.0
  %695 = vmatpush2.xpose.msra.mxu0 0.0
  %696 = vmatprep.subr.mxu0 0.0
  %697 = vmatpush2.xpose.msra.mxu0 0.0
  %698 = vmatprep.subr.mxu0 0.0
  %699 = vmatpush2.xpose.msra.mxu0 0.0
  %700 = vmatprep.subr.mxu0 0.0
  %701 = vmatpush2.xpose.msra.mxu0 0.0
  %702 = vmatprep.subr.mxu0 0.0
  %703 = vmatpush2.xpose.msra.mxu0 0.0
  %704 = vmatprep.subr.mxu0 0.0
  %705 = vmatpush2.xpose.msra.mxu0 0.0
  %706 = vmatprep.subr.mxu0 0.0
  %707 = vmatpush2.xpose.msra.mxu0 0.0
  %708 = vmatprep.subr.mxu0 0.0
  %709 = vmatpush2.xpose.msra.mxu0 0.0
  %710 = vmatprep.subr.mxu0 0.0
  %711 = vmatpush2.xpose.msra.mxu0 0.0
  %712 = vmatprep.subr.mxu0 0.0
  %713 = vmatpush2.xpose.msra.mxu0 0.0
  %714 = vmatprep.subr.mxu0 0.0
  %715 = vmatpush2.xpose.msra.mxu0 0.0
  %716 = vmatprep.subr.mxu0 0.0
  %717 = vmatpush2.xpose.msra.mxu0 0.0
  %718 = vmatprep.subr.mxu0 0.0
  %719 = vmatpush2.xpose.msra.mxu0 0.0
  %720 = vmatprep.mubr.f32.mxu0 0.0
  %721 = vmatmul.mubr.f32.gmra.mxu0 %v648
  %v722 = vpop.f32.mrf.mxu0
  %v723 = vadd.f32 0.0, %v722
  %v724 = vpop.f32.mrf.mxu0
  %725 = vmatprep.mubr.f32.mxu0 0.0
  %726 = vmatmul.mubr.f32.gmra.mxu0 %v650
  %v727 = vpop.f32.mrf.mxu0
  %v728 = vadd.f32 0.0, %v727
  %v729 = vpop.f32.mrf.mxu0
  %730 = vdwg.mxu0
  %v731 = vmul.f32 %v723, 0.35355338
  %v732 = vmul.f32 %v728, 0.35355338
  %v733 = vadd.f32 %v731, %v54
  %v734 = vadd.f32 %v732, %v55
  %v735 = vsel %vm326, %v733, -inf
  %736 = vmax.xlane.f32.xlu0 %v735
  %v737 = vpop.xlane.xlu0 %736
  %v738 = vsel %vm326, %v734, -inf
  %739 = vmax.xlane.f32.xlu0 %v738
  %v740 = vpop.xlane.xlu0 %739
  %v741 = vsub.f32 %v733, %v737
  %v742 = vsub.f32 %v734, %v740
  %v743 = vmul.f32 %v741, 1.442695
  %v744 = vpow.pop %v743
  %v745 = vmul.f32 %v742, 1.442695
  %v746 = vpow.pop %v745
  %v747 = vsel %vm326, %v744, 0.0
  %748 = vadd.xlane.f32.xlu0 %v747
  %v749 = vpop.xlane.xlu0 %748
  %v750 = vsel %vm326, %v746, 0.0
  %751 = vadd.xlane.f32.xlu0 %v750
  %v752 = vpop.xlane.xlu0 %751
  %v753 = vrcp.pop %v749
  %v754 = vrcp.pop %v752
  %v755 = vmul.f32 %v744, %v753
  %v756 = vmul.f32 %v746, %v754
  %757 = vrot.lane.b32.xlu0 %v141, 48
  %v758 = vpop.permute.xlu0 %757
  %759 = vrot.lane.b32.xlu0 %v146, 48
  %v760 = vpop.permute.xlu0 %759
  %v764 = vsel %vm326, %v755, 0
  %v767 = vsel %vm326, %v756, 0
  %769 = vmatprep.subr.mxu0 0.0
  %770 = vmatpush1.msra.mxu0 0.0
  %771 = vmatprep.subr.mxu0 0.0
  %772 = vmatpush1.msra.mxu0 0.0
  %773 = vmatprep.subr.mxu0 0.0
  %774 = vmatpush1.msra.mxu0 0.0
  %775 = vmatprep.subr.mxu0 0.0
  %776 = vmatpush1.msra.mxu0 0.0
  %777 = vmatprep.subr.mxu0 0.0
  %778 = vmatpush1.msra.mxu0 0.0
  %779 = vmatprep.subr.mxu0 0.0
  %780 = vmatpush1.msra.mxu0 0.0
  %781 = vmatprep.subr.mxu0 0.0
  %782 = vmatpush1.msra.mxu0 0.0
  %783 = vmatprep.subr.mxu0 0.0
  %784 = vmatpush1.msra.mxu0 0.0
  %785 = vmatprep.subr.mxu0 0.0
  %786 = vmatpush1.msra.mxu0 0.0
  %787 = vmatprep.subr.mxu0 0.0
  %788 = vmatpush1.msra.mxu0 0.0
  %789 = vmatprep.subr.mxu0 0.0
  %790 = vmatpush1.msra.mxu0 0.0
  %791 = vmatprep.subr.mxu0 0.0
  %792 = vmatpush1.msra.mxu0 0.0
  %793 = vmatprep.subr.mxu0 0.0
  %794 = vmatpush1.msra.mxu0 0.0
  %795 = vmatprep.subr.mxu0 0.0
  %796 = vmatpush1.msra.mxu0 0.0
  %797 = vmatprep.subr.mxu0 0.0
  %798 = vmatpush1.msra.mxu0 %v760
  %799 = vmatprep.subr.mxu0 0.0
  %800 = vmatpush1.msra.mxu0 %v758
  %801 = vmatprep.subr.mxu0 0.0
  %802 = vmatpush2.msra.mxu0 0.0
  %803 = vmatprep.subr.mxu0 0.0
  %804 = vmatpush2.msra.mxu0 0.0
  %805 = vmatprep.subr.mxu0 0.0
  %806 = vmatpush2.msra.mxu0 0.0
  %807 = vmatprep.subr.mxu0 0.0
  %808 = vmatpush2.msra.mxu0 0.0
  %809 = vmatprep.subr.mxu0 0.0
  %810 = vmatpush2.msra.mxu0 0.0
  %811 = vmatprep.subr.mxu0 0.0
  %812 = vmatpush2.msra.mxu0 0.0
  %813 = vmatprep.subr.mxu0 0.0
  %814 = vmatpush2.msra.mxu0 0.0
  %815 = vmatprep.subr.mxu0 0.0
  %816 = vmatpush2.msra.mxu0 0.0
  %817 = vmatprep.subr.mxu0 0.0
  %818 = vmatpush2.msra.mxu0 0.0
  %819 = vmatprep.subr.mxu0 0.0
  %820 = vmatpush2.msra.mxu0 0.0
  %821 = vmatprep.subr.mxu0 0.0
  %822 = vmatpush2.msra.mxu0 0.0
  %823 = vmatprep.subr.mxu0 0.0
  %824 = vmatpush2.msra.mxu0 0.0
  %825 = vmatprep.subr.mxu0 0.0
  %826 = vmatpush2.msra.mxu0 0.0
  %827 = vmatprep.subr.mxu0 0.0
  %828 = vmatpush2.msra.mxu0 0.0
  %829 = vmatprep.subr.mxu0 0.0
  %830 = vmatpush2.msra.mxu0 0.0
  %831 = vmatprep.subr.mxu0 0.0
  %832 = vmatpush2.msra.mxu0 0.0
  %833 = vmatprep.mubr.f32.mxu0 0.0
  %834 = vmatmul.mubr.f32.gmra.mxu0 %v764
  %v835 = vpop.f32.mrf.mxu0
  %v836 = vadd.f32 0.0, %v835
  %v837 = vpop.f32.mrf.mxu0
  %838 = vmatprep.mubr.f32.mxu0 0.0
  %839 = vmatmul.mubr.f32.gmra.mxu0 %v767
  %v840 = vpop.f32.mrf.mxu0
  %v841 = vadd.f32 0.0, %v840
  %v842 = vpop.f32.mrf.mxu0
  %843 = vdwg.mxu0
  %844 = vrot.lane.b32.xlu0 %v222, 104
  %v845 = vpop.permute.xlu0 %844
  %846 = vrot.lane.b32.xlu0 %v227, 104
  %v847 = vpop.permute.xlu0 %846
  %848 = vrot.lane.b32.xlu0 %v141, 72
  %v849 = vpop.permute.xlu0 %848
  %850 = vrot.lane.b32.xlu0 %v146, 72
  %v851 = vpop.permute.xlu0 %850
  %v852 = vsel %vm236, %v845, 0
  %v854 = vsel %vm236, %v847, 0
  %v856 = vsel %vm236, %v849, 0
  %v858 = vsel %vm236, %v851, 0
  %860 = vmatprep.subr.mxu0 0.0
  %861 = vmatpush1.xpose.msra.mxu0 0.0
  %862 = vmatprep.subr.mxu0 0.0
  %863 = vmatpush1.xpose.msra.mxu0 0.0
  %864 = vmatprep.subr.mxu0 0.0
  %865 = vmatpush1.xpose.msra.mxu0 0.0
  %866 = vmatprep.subr.mxu0 0.0
  %867 = vmatpush1.xpose.msra.mxu0 0.0
  %868 = vmatprep.subr.mxu0 0.0
  %869 = vmatpush1.xpose.msra.mxu0 0.0
  %870 = vmatprep.subr.mxu0 0.0
  %871 = vmatpush1.xpose.msra.mxu0 0.0
  %872 = vmatprep.subr.mxu0 0.0
  %873 = vmatpush1.xpose.msra.mxu0 0.0
  %874 = vmatprep.subr.mxu0 0.0
  %875 = vmatpush1.xpose.msra.mxu0 0.0
  %876 = vmatprep.subr.mxu0 0.0
  %877 = vmatpush1.xpose.msra.mxu0 0.0
  %878 = vmatprep.subr.mxu0 0.0
  %879 = vmatpush1.xpose.msra.mxu0 0.0
  %880 = vmatprep.subr.mxu0 0.0
  %881 = vmatpush1.xpose.msra.mxu0 0.0
  %882 = vmatprep.subr.mxu0 0.0
  %883 = vmatpush1.xpose.msra.mxu0 0.0
  %884 = vmatprep.subr.mxu0 0.0
  %885 = vmatpush1.xpose.msra.mxu0 0.0
  %886 = vmatprep.subr.mxu0 0.0
  %887 = vmatpush1.xpose.msra.mxu0 0.0
  %888 = vmatprep.subr.mxu0 0.0
  %889 = vmatpush1.xpose.msra.mxu0 %v858
  %890 = vmatprep.subr.mxu0 0.0
  %891 = vmatpush1.xpose.msra.mxu0 %v856
  %892 = vmatprep.subr.mxu0 0.0
  %893 = vmatpush2.xpose.msra.mxu0 0.0
  %894 = vmatprep.subr.mxu0 0.0
  %895 = vmatpush2.xpose.msra.mxu0 0.0
  %896 = vmatprep.subr.mxu0 0.0
  %897 = vmatpush2.xpose.msra.mxu0 0.0
  %898 = vmatprep.subr.mxu0 0.0
  %899 = vmatpush2.xpose.msra.mxu0 0.0
  %900 = vmatprep.subr.mxu0 0.0
  %901 = vmatpush2.xpose.msra.mxu0 0.0
  %902 = vmatprep.subr.mxu0 0.0
  %903 = vmatpush2.xpose.msra.mxu0 0.0
  %904 = vmatprep.subr.mxu0 0.0
  %905 = vmatpush2.xpose.msra.mxu0 0.0
  %906 = vmatprep.subr.mxu0 0.0
  %907 = vmatpush2.xpose.msra.mxu0 0.0
  %908 = vmatprep.subr.mxu0 0.0
  %909 = vmatpush2.xpose.msra.mxu0 0.0
  %910 = vmatprep.subr.mxu0 0.0
  %911 = vmatpush2.xpose.msra.mxu0 0.0
  %912 = vmatprep.subr.mxu0 0.0
  %913 = vmatpush2.xpose.msra.mxu0 0.0
  %914 = vmatprep.subr.mxu0 0.0
  %915 = vmatpush2.xpose.msra.mxu0 0.0
  %916 = vmatprep.subr.mxu0 0.0
  %917 = vmatpush2.xpose.msra.mxu0 0.0
  %918 = vmatprep.subr.mxu0 0.0
  %919 = vmatpush2.xpose.msra.mxu0 0.0
  %920 = vmatprep.subr.mxu0 0.0
  %921 = vmatpush2.xpose.msra.mxu0 0.0
  %922 = vmatprep.subr.mxu0 0.0
  %923 = vmatpush2.xpose.msra.mxu0 0.0
  %924 = vmatprep.mubr.f32.mxu0 0.0
  %925 = vmatmul.mubr.f32.gmra.mxu0 %v852
  %v926 = vpop.f32.mrf.mxu0
  %v927 = vadd.f32 0.0, %v926
  %v928 = vpop.f32.mrf.mxu0
  %929 = vmatprep.mubr.f32.mxu0 0.0
  %930 = vmatmul.mubr.f32.gmra.mxu0 %v854
  %v931 = vpop.f32.mrf.mxu0
  %v932 = vadd.f32 0.0, %v931
  %v933 = vpop.f32.mrf.mxu0
  %934 = vdwg.mxu0
  %v935 = vmul.f32 %v927, 0.35355338
  %v936 = vmul.f32 %v932, 0.35355338
  %v937 = vadd.f32 %v935, %v54
  %v938 = vadd.f32 %v936, %v55
  %v939 = vsel %vm326, %v937, -inf
  %940 = vmax.xlane.f32.xlu0 %v939
  %v941 = vpop.xlane.xlu0 %940
  %v942 = vsel %vm326, %v938, -inf
  %943 = vmax.xlane.f32.xlu0 %v942
  %v944 = vpop.xlane.xlu0 %943
  %v945 = vsub.f32 %v937, %v941
  %v946 = vsub.f32 %v938, %v944
  %v947 = vmul.f32 %v945, 1.442695
  %v948 = vpow.pop %v947
  %v949 = vmul.f32 %v946, 1.442695
  %v950 = vpow.pop %v949
  %v951 = vsel %vm326, %v948, 0.0
  %952 = vadd.xlane.f32.xlu0 %v951
  %v953 = vpop.xlane.xlu0 %952
  %v954 = vsel %vm326, %v950, 0.0
  %955 = vadd.xlane.f32.xlu0 %v954
  %v956 = vpop.xlane.xlu0 %955
  %v957 = vrcp.pop %v953
  %v958 = vrcp.pop %v956
  %v959 = vmul.f32 %v948, %v957
  %v960 = vmul.f32 %v950, %v958
  %961 = vrot.lane.b32.xlu0 %v141, 40
  %v962 = vpop.permute.xlu0 %961
  %963 = vrot.lane.b32.xlu0 %v146, 40
  %v964 = vpop.permute.xlu0 %963
  %v968 = vsel %vm326, %v959, 0
  %v971 = vsel %vm326, %v960, 0
  %973 = vmatprep.subr.mxu0 0.0
  %974 = vmatpush1.msra.mxu0 0.0
  %975 = vmatprep.subr.mxu0 0.0
  %976 = vmatpush1.msra.mxu0 0.0
  %977 = vmatprep.subr.mxu0 0.0
  %978 = vmatpush1.msra.mxu0 0.0
  %979 = vmatprep.subr.mxu0 0.0
  %980 = vmatpush1.msra.mxu0 0.0
  %981 = vmatprep.subr.mxu0 0.0
  %982 = vmatpush1.msra.mxu0 0.0
  %983 = vmatprep.subr.mxu0 0.0
  %984 = vmatpush1.msra.mxu0 0.0
  %985 = vmatprep.subr.mxu0 0.0
  %986 = vmatpush1.msra.mxu0 0.0
  %987 = vmatprep.subr.mxu0 0.0
  %988 = vmatpush1.msra.mxu0 0.0
  %989 = vmatprep.subr.mxu0 0.0
  %990 = vmatpush1.msra.mxu0 0.0
  %991 = vmatprep.subr.mxu0 0.0
  %992 = vmatpush1.msra.mxu0 0.0
  %993 = vmatprep.subr.mxu0 0.0
  %994 = vmatpush1.msra.mxu0 0.0
  %995 = vmatprep.subr.mxu0 0.0
  %996 = vmatpush1.msra.mxu0 0.0
  %997 = vmatprep.subr.mxu0 0.0
  %998 = vmatpush1.msra.mxu0 0.0
  %999 = vmatprep.subr.mxu0 0.0
  %1000 = vmatpush1.msra.mxu0 0.0
  %1001 = vmatprep.subr.mxu0 0.0
  %1002 = vmatpush1.msra.mxu0 %v964
  %1003 = vmatprep.subr.mxu0 0.0
  %1004 = vmatpush1.msra.mxu0 %v962
  %1005 = vmatprep.subr.mxu0 0.0
  %1006 = vmatpush2.msra.mxu0 0.0
  %1007 = vmatprep.subr.mxu0 0.0
  %1008 = vmatpush2.msra.mxu0 0.0
  %1009 = vmatprep.subr.mxu0 0.0
  %1010 = vmatpush2.msra.mxu0 0.0
  %1011 = vmatprep.subr.mxu0 0.0
  %1012 = vmatpush2.msra.mxu0 0.0
  %1013 = vmatprep.subr.mxu0 0.0
  %1014 = vmatpush2.msra.mxu0 0.0
  %1015 = vmatprep.subr.mxu0 0.0
  %1016 = vmatpush2.msra.mxu0 0.0
  %1017 = vmatprep.subr.mxu0 0.0
  %1018 = vmatpush2.msra.mxu0 0.0
  %1019 = vmatprep.subr.mxu0 0.0
  %1020 = vmatpush2.msra.mxu0 0.0
  %1021 = vmatprep.subr.mxu0 0.0
  %1022 = vmatpush2.msra.mxu0 0.0
  %1023 = vmatprep.subr.mxu0 0.0
  %1024 = vmatpush2.msra.mxu0 0.0
  %1025 = vmatprep.subr.mxu0 0.0
  %1026 = vmatpush2.msra.mxu0 0.0
  %1027 = vmatprep.subr.mxu0 0.0
  %1028 = vmatpush2.msra.mxu0 0.0
  %1029 = vmatprep.subr.mxu0 0.0
  %1030 = vmatpush2.msra.mxu0 0.0
  %1031 = vmatprep.subr.mxu0 0.0
  %1032 = vmatpush2.msra.mxu0 0.0
  %1033 = vmatprep.subr.mxu0 0.0
  %1034 = vmatpush2.msra.mxu0 0.0
  %1035 = vmatprep.subr.mxu0 0.0
  %1036 = vmatpush2.msra.mxu0 0.0
  %1037 = vmatprep.mubr.f32.mxu0 0.0
  %1038 = vmatmul.mubr.f32.gmra.mxu0 %v968
  %v1039 = vpop.f32.mrf.mxu0
  %v1040 = vadd.f32 0.0, %v1039
  %v1041 = vpop.f32.mrf.mxu0
  %1042 = vmatprep.mubr.f32.mxu0 0.0
  %1043 = vmatmul.mubr.f32.gmra.mxu0 %v971
  %v1044 = vpop.f32.mrf.mxu0
  %v1045 = vadd.f32 0.0, %v1044
  %v1046 = vpop.f32.mrf.mxu0
  %1047 = vdwg.mxu0
  %1050 = vrot.lane.b32.xlu0 %v632, 8
  %v1051 = vpop.permute.xlu0 %1050
  %1052 = vrot.lane.b32.xlu0 %v637, 8
  %v1053 = vpop.permute.xlu0 %1052
  %1058 = vrot.lane.b32.xlu0 %v836, 16
  %v1059 = vpop.permute.xlu0 %1058
  %1060 = vrot.lane.b32.xlu0 %v841, 16
  %v1061 = vpop.permute.xlu0 %1060
  %1066 = vrot.lane.b32.xlu0 %v1040, 24
  %v1067 = vpop.permute.xlu0 %1066
  %1068 = vrot.lane.b32.xlu0 %v1045, 24
  %v1069 = vpop.permute.xlu0 %1068
  %v1072 = vsel %vm236, %v428, %v1051
  %v1073 = vsel %vm236, %v433, %v1053
  %v1074 = vsel %vm326, %v1072, %v1059
  %v1075 = vsel %vm326, %v1073, %v1061
  %vm1076 = vcmask 195584
  %v1077 = vsel %vm1076, %v1074, %v1067
  %v1078 = vsel %vm1076, %v1075, %v1069
  %v1079 = vld [vmem:[%s5] sm:$0xff]
  %v1080 = vld [vmem:[%s5 + $0x8] sm:$0xff]
  %v1081 = vld [vmem:[%s5 + $0x10] sm:$0xff]
  %v1082 = vld [vmem:[%s5 + $0x18] sm:$0xff]
  %v1083 = vld [vmem:[%s6] sm:$0x1]
  %v1085 = vlaneseq
  %v1086 = vshrl.u32 %v1085, 7
  %v1087 = vsub.s32 0, %v1086
  %v1088 = vrot.slane %v1083, %v1087
  %v1091 = vsel %vm67, %v1077, 0
  %v1094 = vsel %vm67, %v1078, 0
  %1096 = vmatprep.subr.mxu0 0.0
  %1097 = vmatpush1.msra.mxu0 0.0
  %1098 = vmatprep.subr.mxu0 0.0
  %1099 = vmatpush1.msra.mxu0 0.0
  %1100 = vmatprep.subr.mxu0 0.0
  %1101 = vmatpush1.msra.mxu0 0.0
  %1102 = vmatprep.subr.mxu0 0.0
  %1103 = vmatpush1.msra.mxu0 0.0
  %1104 = vmatprep.subr.mxu0 0.0
  %1105 = vmatpush1.msra.mxu0 0.0
  %1106 = vmatprep.subr.mxu0 0.0
  %1107 = vmatpush1.msra.mxu0 0.0
  %1108 = vmatprep.subr.mxu0 0.0
  %1109 = vmatpush1.msra.mxu0 0.0
  %1110 = vmatprep.subr.mxu0 0.0
  %1111 = vmatpush1.msra.mxu0 0.0
  %1112 = vmatprep.subr.mxu0 0.0
  %1113 = vmatpush1.msra.mxu0 0.0
  %1114 = vmatprep.subr.mxu0 0.0
  %1115 = vmatpush1.msra.mxu0 0.0
  %1116 = vmatprep.subr.mxu0 0.0
  %1117 = vmatpush1.msra.mxu0 0.0
  %1118 = vmatprep.subr.mxu0 0.0
  %1119 = vmatpush1.msra.mxu0 0.0
  %1120 = vmatprep.subr.mxu0 0.0
  %1121 = vmatpush1.msra.mxu0 %v1082
  %1122 = vmatprep.subr.mxu0 0.0
  %1123 = vmatpush1.msra.mxu0 %v1081
  %1124 = vmatprep.subr.mxu0 0.0
  %1125 = vmatpush1.msra.mxu0 %v1080
  %1126 = vmatprep.subr.mxu0 0.0
  %1127 = vmatpush1.msra.mxu0 %v1079
  %1128 = vmatprep.subr.mxu0 0.0
  %1129 = vmatpush2.msra.mxu0 0.0
  %1130 = vmatprep.subr.mxu0 0.0
  %1131 = vmatpush2.msra.mxu0 0.0
  %1132 = vmatprep.subr.mxu0 0.0
  %1133 = vmatpush2.msra.mxu0 0.0
  %1134 = vmatprep.subr.mxu0 0.0
  %1135 = vmatpush2.msra.mxu0 0.0
  %1136 = vmatprep.subr.mxu0 0.0
  %1137 = vmatpush2.msra.mxu0 0.0
  %1138 = vmatprep.subr.mxu0 0.0
  %1139 = vmatpush2.msra.mxu0 0.0
  %1140 = vmatprep.subr.mxu0 0.0
  %1141 = vmatpush2.msra.mxu0 0.0
  %1142 = vmatprep.subr.mxu0 0.0
  %1143 = vmatpush2.msra.mxu0 0.0
  %1144 = vmatprep.subr.mxu0 0.0
  %1145 = vmatpush2.msra.mxu0 0.0
  %1146 = vmatprep.subr.mxu0 0.0
  %1147 = vmatpush2.msra.mxu0 0.0
  %1148 = vmatprep.subr.mxu0 0.0
  %1149 = vmatpush2.msra.mxu0 0.0
  %1150 = vmatprep.subr.mxu0 0.0
  %1151 = vmatpush2.msra.mxu0 0.0
  %1152 = vmatprep.subr.mxu0 0.0
  %1153 = vmatpush2.msra.mxu0 0.0
  %1154 = vmatprep.subr.mxu0 0.0
  %1155 = vmatpush2.msra.mxu0 0.0
  %1156 = vmatprep.subr.mxu0 0.0
  %1157 = vmatpush2.msra.mxu0 0.0
  %1158 = vmatprep.subr.mxu0 0.0
  %1159 = vmatpush2.msra.mxu0 0.0
  %1160 = vmatprep.mubr.f32.mxu0 0.0
  %1161 = vmatmul.mubr.f32.gmra.mxu0 %v1091
  %v1162 = vpop.f32.mrf.mxu0
  %v1163 = vadd.f32 %v1088, %v1162
  %v1164 = vpop.f32.mrf.mxu0
  %1165 = vmatprep.mubr.f32.mxu0 0.0
  %1166 = vmatmul.mubr.f32.gmra.mxu0 %v1094
  %v1167 = vpop.f32.mrf.mxu0
  %v1168 = vadd.f32 %v1088, %v1167
  %v1169 = vpop.f32.mrf.mxu0
  %1170 = vdwg.mxu0
  %v1171 = vadd.f32 %v50, %v1163
  %v1172 = vadd.f32 %v51, %v1168
  %v1173 = vld [vmem:[%s11] sm:$0x1]
  %v1174 = vld [vmem:[%s12] sm:$0x1]
  %v1175 = vsel %vm67, %v1171, 0.0
  %1176 = vadd.xlane.f32.xlu0 %v1175
  %v1177 = vpop.xlane.xlu0 %1176
  %v1178 = vsel %vm67, %v1172, 0.0
  %1179 = vadd.xlane.f32.xlu0 %v1178
  %v1180 = vpop.xlane.xlu0 %1179
  %v1181 = vrcp.pop 32.0
  %v1182 = vmul.f32 %v1177, %v1181
  %v1183 = vmul.f32 %v1180, %v1181
  %v1184 = vsub.f32 %v1171, %v1182
  %v1185 = vsub.f32 %v1172, %v1183
  %v1186 = vmul.f32 %v1184, %v1184
  %v1187 = vmul.f32 %v1185, %v1185
  %v1188 = vsel %vm67, %v1186, 0.0
  %1189 = vadd.xlane.f32.xlu0 %v1188
  %v1190 = vpop.xlane.xlu0 %1189
  %v1191 = vsel %vm67, %v1187, 0.0
  %1192 = vadd.xlane.f32.xlu0 %v1191
  %v1193 = vpop.xlane.xlu0 %1192
  %v1194 = vmul.f32 %v1190, %v1181
  %v1195 = vmul.f32 %v1193, %v1181
  %v1196 = vadd.f32 %v1194, 1e-05
  %v1197 = vadd.f32 %v1195, 1e-05
  %v1198 = vrsqrt.pop %v1196
  %v1199 = vrsqrt.pop %v1197
  %v1200 = vmul.f32 %v1184, %v1198
  %v1201 = vmul.f32 %v1185, %v1199
  %v1203 = vlaneseq
  %v1204 = vshrl.u32 %v1203, 7
  %v1205 = vsub.s32 0, %v1204
  %v1206 = vrot.slane %v1173, %v1205
  %v1208 = vmul.f32 %v1200, %v1206
  %v1209 = vmul.f32 %v1201, %v1206
  %v1211 = vlaneseq
  %v1212 = vshrl.u32 %v1211, 7
  %v1213 = vsub.s32 0, %v1212
  %v1214 = vrot.slane %v1174, %v1213
  %v1216 = vadd.f32 %v1208, %v1214
  %v1217 = vadd.f32 %v1209, %v1214
  %v1218 = vld [vmem:[%s7] sm:$0xff]
  %v1219 = vld [vmem:[%s7 + $0x8] sm:$0xff]
  %v1220 = vld [vmem:[%s7 + $0x10] sm:$0xff]
  %v1221 = vld [vmem:[%s7 + $0x18] sm:$0xff]
  %v1222 = vld [vmem:[%s8] sm:$0x1]
  %v1224 = vlaneseq
  %v1225 = vshrl.u32 %v1224, 7
  %v1226 = vsub.s32 0, %v1225
  %v1227 = vrot.slane %v1222, %v1226
  %v1230 = vsel %vm67, %v1216, 0
  %v1233 = vsel %vm67, %v1217, 0
  %1235 = vmatprep.subr.mxu0 0.0
  %1236 = vmatpush1.msra.mxu0 0.0
  %1237 = vmatprep.subr.mxu0 0.0
  %1238 = vmatpush1.msra.mxu0 0.0
  %1239 = vmatprep.subr.mxu0 0.0
  %1240 = vmatpush1.msra.mxu0 0.0
  %1241 = vmatprep.subr.mxu0 0.0
  %1242 = vmatpush1.msra.mxu0 0.0
  %1243 = vmatprep.subr.mxu0 0.0
  %1244 = vmatpush1.msra.mxu0 0.0
  %1245 = vmatprep.subr.mxu0 0.0
  %1246 = vmatpush1.msra.mxu0 0.0
  %1247 = vmatprep.subr.mxu0 0.0
  %1248 = vmatpush1.msra.mxu0 0.0
  %1249 = vmatprep.subr.mxu0 0.0
  %1250 = vmatpush1.msra.mxu0 0.0
  %1251 = vmatprep.subr.mxu0 0.0
  %1252 = vmatpush1.msra.mxu0 0.0
  %1253 = vmatprep.subr.mxu0 0.0
  %1254 = vmatpush1.msra.mxu0 0.0
  %1255 = vmatprep.subr.mxu0 0.0
  %1256 = vmatpush1.msra.mxu0 0.0
  %1257 = vmatprep.subr.mxu0 0.0
  %1258 = vmatpush1.msra.mxu0 0.0
  %1259 = vmatprep.subr.mxu0 0.0
  %1260 = vmatpush1.msra.mxu0 %v1221
  %1261 = vmatprep.subr.mxu0 0.0
  %1262 = vmatpush1.msra.mxu0 %v1220
  %1263 = vmatprep.subr.mxu0 0.0
  %1264 = vmatpush1.msra.mxu0 %v1219
  %1265 = vmatprep.subr.mxu0 0.0
  %1266 = vmatpush1.msra.mxu0 %v1218
  %1267 = vmatprep.subr.mxu0 0.0
  %1268 = vmatpush2.msra.mxu0 0.0
  %1269 = vmatprep.subr.mxu0 0.0
  %1270 = vmatpush2.msra.mxu0 0.0
  %1271 = vmatprep.subr.mxu0 0.0
  %1272 = vmatpush2.msra.mxu0 0.0
  %1273 = vmatprep.subr.mxu0 0.0
  %1274 = vmatpush2.msra.mxu0 0.0
  %1275 = vmatprep.subr.mxu0 0.0
  %1276 = vmatpush2.msra.mxu0 0.0
  %1277 = vmatprep.subr.mxu0 0.0
  %1278 = vmatpush2.msra.mxu0 0.0
  %1279 = vmatprep.subr.mxu0 0.0
  %1280 = vmatpush2.msra.mxu0 0.0
  %1281 = vmatprep.subr.mxu0 0.0
  %1282 = vmatpush2.msra.mxu0 0.0
  %1283 = vmatprep.subr.mxu0 0.0
  %1284 = vmatpush2.msra.mxu0 0.0
  %1285 = vmatprep.subr.mxu0 0.0
  %1286 = vmatpush2.msra.mxu0 0.0
  %1287 = vmatprep.subr.mxu0 0.0
  %1288 = vmatpush2.msra.mxu0 0.0
  %1289 = vmatprep.subr.mxu0 0.0
  %1290 = vmatpush2.msra.mxu0 0.0
  %1291 = vmatprep.subr.mxu0 0.0
  %1292 = vmatpush2.msra.mxu0 0.0
  %1293 = vmatprep.subr.mxu0 0.0
  %1294 = vmatpush2.msra.mxu0 0.0
  %1295 = vmatprep.subr.mxu0 0.0
  %1296 = vmatpush2.msra.mxu0 0.0
  %1297 = vmatprep.subr.mxu0 0.0
  %1298 = vmatpush2.msra.mxu0 0.0
  %1299 = vmatprep.mubr.f32.mxu0 0.0
  %1300 = vmatmul.mubr.f32.gmra.mxu0 %v1230
  %v1301 = vpop.f32.mrf.mxu0
  %v1302 = vadd.f32 %v1227, %v1301
  %v1303 = vpop.f32.mrf.mxu0
  %1304 = vmatprep.mubr.f32.mxu0 0.0
  %1305 = vmatmul.mubr.f32.gmra.mxu0 %v1233
  %v1306 = vpop.f32.mrf.mxu0
  %v1307 = vadd.f32 %v1227, %v1306
  %v1308 = vpop.f32.mrf.mxu0
  %1309 = vdwg.mxu0
  %v1310 = vmax.f32 %v1302, 0.0
  %v1311 = vmax.f32 %v1307, 0.0
  %v1312 = vld [vmem:[%s9] sm:$0xff]
  %v1313 = vld [vmem:[%s9 + $0x8] sm:$0xff]
  %v1314 = vld [vmem:[%s9 + $0x10] sm:$0xff]
  %v1315 = vld [vmem:[%s9 + $0x18] sm:$0xff]
  %v1316 = vld [vmem:[%s9 + $0x20] sm:$0xff]
  %v1317 = vld [vmem:[%s9 + $0x28] sm:$0xff]
  %v1318 = vld [vmem:[%s9 + $0x30] sm:$0xff]
  %v1319 = vld [vmem:[%s9 + $0x38] sm:$0xff]
  %v1320 = vld [vmem:[%s10] sm:$0x1]
  %v1322 = vlaneseq
  %v1323 = vshrl.u32 %v1322, 7
  %v1324 = vsub.s32 0, %v1323
  %v1325 = vrot.slane %v1320, %v1324
  %vm1327 = vcmask 523264
  %v1329 = vsel %vm1327, %v1310, 0
  %v1332 = vsel %vm1327, %v1311, 0
  %1334 = vmatprep.subr.mxu0 0.0
  %1335 = vmatpush1.msra.mxu0 0.0
  %1336 = vmatprep.subr.mxu0 0.0
  %1337 = vmatpush1.msra.mxu0 0.0
  %1338 = vmatprep.subr.mxu0 0.0
  %1339 = vmatpush1.msra.mxu0 0.0
  %1340 = vmatprep.subr.mxu0 0.0
  %1341 = vmatpush1.msra.mxu0 0.0
  %1342 = vmatprep.subr.mxu0 0.0
  %1343 = vmatpush1.msra.mxu0 0.0
  %1344 = vmatprep.subr.mxu0 0.0
  %1345 = vmatpush1.msra.mxu0 0.0
  %1346 = vmatprep.subr.mxu0 0.0
  %1347 = vmatpush1.msra.mxu0 0.0
  %1348 = vmatprep.subr.mxu0 0.0
  %1349 = vmatpush1.msra.mxu0 0.0
  %1350 = vmatprep.subr.mxu0 0.0
  %1351 = vmatpush1.msra.mxu0 %v1319
  %1352 = vmatprep.subr.mxu0 0.0
  %1353 = vmatpush1.msra.mxu0 %v1318
  %1354 = vmatprep.subr.mxu0 0.0
  %1355 = vmatpush1.msra.mxu0 %v1317
  %1356 = vmatprep.subr.mxu0 0.0
  %1357 = vmatpush1.msra.mxu0 %v1316
  %1358 = vmatprep.subr.mxu0 0.0
  %1359 = vmatpush1.msra.mxu0 %v1315
  %1360 = vmatprep.subr.mxu0 0.0
  %1361 = vmatpush1.msra.mxu0 %v1314
  %1362 = vmatprep.subr.mxu0 0.0
  %1363 = vmatpush1.msra.mxu0 %v1313
  %1364 = vmatprep.subr.mxu0 0.0
  %1365 = vmatpush1.msra.mxu0 %v1312
  %1366 = vmatprep.subr.mxu0 0.0
  %1367 = vmatpush2.msra.mxu0 0.0
  %1368 = vmatprep.subr.mxu0 0.0
  %1369 = vmatpush2.msra.mxu0 0.0
  %1370 = vmatprep.subr.mxu0 0.0
  %1371 = vmatpush2.msra.mxu0 0.0
  %1372 = vmatprep.subr.mxu0 0.0
  %1373 = vmatpush2.msra.mxu0 0.0
  %1374 = vmatprep.subr.mxu0 0.0
  %1375 = vmatpush2.msra.mxu0 0.0
  %1376 = vmatprep.subr.mxu0 0.0
  %1377 = vmatpush2.msra.mxu0 0.0
  %1378 = vmatprep.subr.mxu0 0.0
  %1379 = vmatpush2.msra.mxu0 0.0
  %1380 = vmatprep.subr.mxu0 0.0
  %1381 = vmatpush2.msra.mxu0 0.0
  %1382 = vmatprep.subr.mxu0 0.0
  %1383 = vmatpush2.msra.mxu0 0.0
  %1384 = vmatprep.subr.mxu0 0.0
  %1385 = vmatpush2.msra.mxu0 0.0
  %1386 = vmatprep.subr.mxu0 0.0
  %1387 = vmatpush2.msra.mxu0 0.0
  %1388 = vmatprep.subr.mxu0 0.0
  %1389 = vmatpush2.msra.mxu0 0.0
  %1390 = vmatprep.subr.mxu0 0.0
  %1391 = vmatpush2.msra.mxu0 0.0
  %1392 = vmatprep.subr.mxu0 0.0
  %1393 = vmatpush2.msra.mxu0 0.0
  %1394 = vmatprep.subr.mxu0 0.0
  %1395 = vmatpush2.msra.mxu0 0.0
  %1396 = vmatprep.subr.mxu0 0.0
  %1397 = vmatpush2.msra.mxu0 0.0
  %1398 = vmatprep.mubr.f32.mxu0 0.0
  %1399 = vmatmul.mubr.f32.gmra.mxu0 %v1329
  %v1400 = vpop.f32.mrf.mxu0
  %v1401 = vadd.f32 %v1325, %v1400
  %v1402 = vpop.f32.mrf.mxu0
  %1403 = vmatprep.mubr.f32.mxu0 0.0
  %1404 = vmatmul.mubr.f32.gmra.mxu0 %v1332
  %v1405 = vpop.f32.mrf.mxu0
  %v1406 = vadd.f32 %v1325, %v1405
  %v1407 = vpop.f32.mrf.mxu0
  %1408 = vdwg.mxu0
  %v1409 = vadd.f32 %v1216, %v1401
  %v1410 = vadd.f32 %v1217, %v1406
  %v1411 = vld [vmem:[%s13] sm:$0x1]
  %v1412 = vld [vmem:[%s14] sm:$0x1]
  %v1413 = vsel %vm67, %v1409, 0.0
  %1414 = vadd.xlane.f32.xlu0 %v1413
  %v1415 = vpop.xlane.xlu0 %1414
  %v1416 = vsel %vm67, %v1410, 0.0
  %1417 = vadd.xlane.f32.xlu0 %v1416
  %v1418 = vpop.xlane.xlu0 %1417
  %v1419 = vmul.f32 %v1415, %v1181
  %v1420 = vmul.f32 %v1418, %v1181
  %v1421 = vsub.f32 %v1409, %v1419
  %v1422 = vsub.f32 %v1410, %v1420
  %v1423 = vmul.f32 %v1421, %v1421
  %v1424 = vmul.f32 %v1422, %v1422
  %v1425 = vsel %vm67, %v1423, 0.0
  %1426 = vadd.xlane.f32.xlu0 %v1425
  %v1427 = vpop.xlane.xlu0 %1426
  %v1428 = vsel %vm67, %v1424, 0.0
  %1429 = vadd.xlane.f32.xlu0 %v1428
  %v1430 = vpop.xlane.xlu0 %1429
  %v1431 = vmul.f32 %v1427, %v1181
  %v1432 = vmul.f32 %v1430, %v1181
  %v1433 = vadd.f32 %v1431, 1e-05
  %v1434 = vadd.f32 %v1432, 1e-05
  %v1435 = vrsqrt.pop %v1433
  %v1436 = vrsqrt.pop %v1434
  %v1437 = vmul.f32 %v1421, %v1435
  %v1438 = vmul.f32 %v1422, %v1436
  %v1440 = vlaneseq
  %v1441 = vshrl.u32 %v1440, 7
  %v1442 = vsub.s32 0, %v1441
  %v1443 = vrot.slane %v1411, %v1442
  %v1445 = vmul.f32 %v1437, %v1443
  %v1446 = vmul.f32 %v1438, %v1443
  %v1448 = vlaneseq
  %v1449 = vshrl.u32 %v1448, 7
  %v1450 = vsub.s32 0, %v1449
  %v1451 = vrot.slane %v1412, %v1450
  %v1453 = vadd.f32 %v1445, %v1451
  %v1454 = vadd.f32 %v1446, %v1451
  %1455 = vst.msk [vmem:[%s15] sm:$0xff] %vm67, %v1453
  %1456 = vst.msk [vmem:[%s15 + $0x8] sm:$0xff] %vm67, %v1454
  // Predicated region
  $region62: #{vanilla_transformer_forward.5} parent=0 // pred_check
    _
  $region63: #{vanilla_transformer_forward.5} parent=0 // pred_check_branch
    %1458 = sbr.rel (0) target = $region65
  $region64: #{vanilla_transformer_forward.5} parent=0 // pred_region
    _
  $region65: #{vanilla_transformer_forward.5} parent=0 // pred_fallthru
    _
  // Predicated region
  $region66: #{vanilla_transformer_forward.5} parent=0 // pred_check
    _
  $region67: #{vanilla_transformer_forward.5} parent=0 // pred_check_branch
    %1460 = sbr.rel (0) target = $region69
  $region68: #{vanilla_transformer_forward.5} parent=0 // pred_region
    _
  $region69: #{vanilla_transformer_forward.5} parent=0 // pred_fallthru
    _

</llo_original>
